<compile_context>
chip_gen: v5e
topology: v5e:2x2
jax: 0.10.0
libtpu: 0.0.40
codegen_flags: <defaults>
</compile_context>

<pallas_src>
import math

import numpy as np

import jax
import jax.numpy as jnp
from jax.experimental import pallas as pl
from jax.experimental.pallas import tpu as pltpu


# Set to jnp.bfloat16 on v6e/v7x for native-bf16 MXU throughput (keep f32
# accumulation); must be re-validated against the output tolerance.
_MATMUL_DTYPE = jnp.float32


# ----------------------------------------------------------------------------
# Tiling / budget helpers
# ----------------------------------------------------------------------------
def _choose_b_tile(B, HW, lane_target=1024):
    """Images packed per grid step along the lane axis.

    Largest divisor of B with b_tile*HW <= lane_target, but keep >= 2 grid
    steps when B >= 2 so both v7x TensorCores get work.
    """
    best = 1
    for d in range(1, B + 1):
        if B % d != 0:
            continue
        if d * HW > max(lane_target, HW):
            continue
        if B >= 2 and B // d < 2:
            continue
        best = d
    return best


def _pad_width_for_lanes(H, Wf):
    """Smallest Wf_pad >= Wf with (H*Wf_pad) % 128 == 0 (skip if > 2x work)."""
    step = 128 // math.gcd(H, 128)
    Wf_pad = ((Wf + step - 1) // step) * step
    return Wf_pad if Wf_pad <= 2 * Wf else Wf


def _vmem_budget_bytes(C_in, C_out, KH, KW, L, with_skip):
    """Explicit scoped-VMEM request: double-buffered blocks + resident
    weights/mask + in-kernel temporaries, with headroom; capped below the
    smallest physical VMEM (v7x TC: 64 MiB)."""
    f32 = 4
    taps = KH * KW
    x_b = C_in * L * f32
    o_b = C_out * L * f32
    m_b = taps * L * f32 if taps > 1 else 0
    w_b = taps * C_in * C_out * f32 + C_out * f32
    need = 2 * x_b * (2 if with_skip else 1) + 2 * o_b + m_b + w_b
    need += 3 * x_b + 2 * o_b        # zero-halo copy, masked tap slice, f32 acc
    return int(min(56 * 2**20, max(32 * 2**20, 2 * need)))


def _tap_masks(H, W, KH, KW, b_tile):
    """(KH*KW, b_tile*H*W) 0/1 f32 mask of valid 'same'-padding positions per
    tap.  Per-tap only (broadcast over C_in in-kernel).  Because it is built
    per image and tiled along the lane axis it also zeroes taps that would
    cross image seams when several images share one grid step."""
    h = np.arange(H)[:, None]
    w = np.arange(W)[None, :]
    rows = []
    for kh in range(KH):
        for kw in range(KW):
            dh, dw = kh - KH // 2, kw - KW // 2
            ok = ((h + dh >= 0) & (h + dh < H) &
                  (w + dw >= 0) & (w + dw < W)).reshape(1, H * W)
            rows.append(np.tile(ok, (1, b_tile)))
    return jnp.asarray(np.concatenate(rows, axis=0).astype(np.float32))


# ----------------------------------------------------------------------------
# Pallas conv kernel: 'same'-padded KxK conv + bias (+LeakyReLU, + fused skip).
# One lane-batched group of images per grid step; 3x3 conv = 9 accumulating
# (C_out, C_in) @ (C_in, L) MXU dots on shifted slices of one zero-halo copy.
# ----------------------------------------------------------------------------
def _make_conv_kernel(C_in, C_out, KH, KW, W_img, leaky, with_skip,
                      op_dtype=_MATMUL_DTYPE):
    taps = [(kh - KH // 2, kw - KW // 2) for kh in range(KH) for kw in range(KW)]
    fused = len(taps) > 1
    pad = (KH // 2) * W_img + (KW // 2)

    def kernel(*refs):
        refs = list(refs)
        x_ref = refs.pop(0)                              # (1, C_in, L)
        skip_ref = refs.pop(0) if with_skip else None    # (1, C_in, L)
        mask_ref = refs.pop(0) if fused else None        # (KH*KW, L)
        w_ref, b_ref, o_ref = refs                       # (T,C_out,C_in),(C_out,1),(1,C_out,L)

        x = x_ref[0]                                     # (C_in, L), L on lanes
        if with_skip:
            x = x + skip_ref[0]                          # fused residual add (f32)
        L = x.shape[-1]

        if fused:
            xw = x.astype(op_dtype)
            # Single zero-halo copy (~1.07x input) so every shifted tap is a
            # static in-bounds lane slice; no (Ktot, L) patches buffer.
            halo = jnp.zeros((C_in, pad), op_dtype)
            xp = jnp.concatenate([halo, xw, halo], axis=1)      # (C_in, L + 2*pad)
            acc = None
            for t, (dh, dw) in enumerate(taps):
                if dh == 0 and dw == 0:
                    piece = xw                           # center tap: no slice, no mask
                else:
                    s = dh * W_img + dw
                    piece = (xp[:, pad + s:pad + s + L]
                             * mask_ref[t:t + 1, :].astype(op_dtype))
                d = jnp.dot(w_ref[t].astype(op_dtype), piece,
                            preferred_element_type=jnp.float32)
                acc = d if acc is None else acc + d
        else:                                            # 1x1 conv
            acc = jnp.dot(w_ref[0].astype(op_dtype), x.astype(op_dtype),
                          preferred_element_type=jnp.float32)

        acc = acc + b_ref[...]                           # (C_out, 1) lane-broadcast
        if leaky:
            acc = jnp.where(acc > 0, acc, 0.01 * acc)    # LeakyReLU(0.01)
        o_ref[0] = acc.astype(o_ref.dtype)               # lane-dense store

    return kernel


def conv2d_flat(x_flat, w, b, *, H, W, leaky, skip_flat=None, lane_target=1024):
    """'Same'-padded KxK conv + bias (+LeakyReLU, optional fused skip add).

    x_flat : (B, C_in, H*W) f32      (NCHW with spatial flattened onto lanes)
    w      : (KH, KW, C_in, C_out) f32
    b      : (C_out,) f32
    skip   : optional (B, C_in, H*W) f32, added to x inside the kernel
    returns: (B, C_out, H*W) f32
    """
    B, C_in, HW = x_flat.shape
    KH, KW, wc_in, C_out = w.shape
    assert wc_in == C_in and HW == H * W

    b_tile = _choose_b_tile(B, HW, lane_target)
    G = B // b_tile
    L = b_tile * HW
    fused = KH * KW > 1
    with_skip = skip_flat is not None

    def group(a):        # (B, C, HW) -> (G, C, b_tile*HW), images lane-contiguous
        if b_tile == 1:
            return a
        C = a.shape[1]
        return (a.reshape(G, b_tile, C, HW)
                 .transpose(0, 2, 1, 3)
                 .reshape(G, C, L))

    # Per-tap weight matrices (KH*KW, C_out, C_in) + column bias, pre-flattened once.
    w_taps = jnp.transpose(w.reshape(KH * KW, C_in, C_out), (0, 2, 1)).astype(jnp.float32)
    b_col = b.reshape(C_out, 1).astype(jnp.float32)

    args = [group(x_flat)]
    specs = [pl.BlockSpec((1, C_in, L), lambda g: (g, 0, 0))]
    if with_skip:
        args.append(group(skip_flat))
        specs.append(pl.BlockSpec((1, C_in, L), lambda g: (g, 0, 0)))
    if fused:
        args.append(_tap_masks(H, W, KH, KW, b_tile))          # (KH*KW, L), resident
        specs.append(pl.BlockSpec((KH * KW, L), lambda g: (0, 0)))
    args += [w_taps, b_col]
    specs += [pl.BlockSpec((KH * KW, C_out, C_in), lambda g: (0, 0, 0)),
              pl.BlockSpec((C_out, 1), lambda g: (0, 0))]

    kernel = _make_conv_kernel(C_in, C_out, KH, KW, W, leaky, with_skip)
    out_g = pl.pallas_call(
        kernel,
        out_shape=jax.ShapeDtypeStruct((G, C_out, L), jnp.float32),
        grid=(G,),
        in_specs=specs,
        out_specs=pl.BlockSpec((1, C_out, L), lambda g: (g, 0, 0)),
        compiler_params=pltpu.CompilerParams(
            dimension_semantics=("parallel",),
            vmem_limit_bytes=_vmem_budget_bytes(C_in, C_out, KH, KW, L, with_skip)),
    )(*args)

    if b_tile == 1:
        return out_g
    return (out_g.reshape(G, C_out, b_tile, HW)
                 .transpose(0, 2, 1, 3)
                 .reshape(B, C_out, HW))


# ----------------------------------------------------------------------------
# FourierConv forward (wrapper glue: FFTs, lane padding of the half-spectrum)
# ----------------------------------------------------------------------------
def fourier_conv_forward(x_nchw, p):
    N, C, H, W = x_nchw.shape
    dim = p["w_in"].shape[-1]
    # conv_real/conv_imag act on rfft2(x) (C channels) -> the module is only
    # shape-consistent when in_channel == dim; fail loudly otherwise.
    assert p["w_real"].shape[2] == C, "FourierConv requires in_channel == dim"

    x_flat = x_nchw.reshape(N, C, H * W).astype(jnp.float32)

    # conv_in + LeakyReLU  ->  skip
    skip = conv2d_flat(x_flat, p["w_in"], p["b_in"], H=H, W=W, leaky=True)

    # Spectral branch.
    # TODO(synk): rfft2/irfft2 have no Pallas primitive; they stay in plain JAX.
    xf = jnp.fft.rfft2(x_nchw.astype(jnp.float32), s=(H, W), axes=(-2, -1))
    Wf = W // 2 + 1
    # Zero-pad the half-spectrum width so H*Wf_pad is a 128 multiple: unmasked,
    # lane-dense stores in the spectral convs.  The zero columns do not change
    # the 'same' conv on the first Wf columns and are sliced off before irfft.
    Wf_pad = _pad_width_for_lanes(H, Wf)
    pad_cols = Wf_pad - Wf

    def spec_conv(part, w, b):                       # part: (N, C, H, Wf) real
        if pad_cols:
            part = jnp.pad(part, ((0, 0), (0, 0), (0, 0), (0, pad_cols)))
        y = conv2d_flat(part.reshape(N, C, H * Wf_pad), w, b,
                        H=H, W=Wf_pad, leaky=True)
        y = y.reshape(N, dim, H, Wf_pad)
        return y[..., :Wf] if pad_cols else y

    # real/imag convs run directly on xf.real / xf.imag: no stacked-spectrum
    # copy through HBM just to share one pallas_call.
    f_real = spec_conv(jnp.real(xf), p["w_real"], p["b_real"])
    f_imag = spec_conv(jnp.imag(xf), p["w_imag"], p["b_imag"])
    rec = jnp.fft.irfft2(jax.lax.complex(f_real, f_imag), s=(H, W), axes=(-2, -1))

    # conv_out (1x1) with the residual add fused into the kernel
    out = conv2d_flat(rec.reshape(N, dim, H * W).astype(jnp.float32),
                      p["w_out"], p["b_out"], H=H, W=W, leaky=False,
                      skip_flat=skip)
    return out.reshape(N, dim, H, W)


# ----------------------------------------------------------------------------
# Deterministic parameter init (PyTorch Conv2d-style uniform bounds)
# ----------------------------------------------------------------------------
def init_params(key, in_channel, dim):
    def conv_init(k, kh, kw, cin, cout):
        k1, k2 = jax.random.split(k)
        bound = 1.0 / math.sqrt(cin * kh * kw)
        w = jax.random.uniform(k1, (kh, kw, cin, cout), jnp.float32, -bound, bound)
        b = jax.random.uniform(k2, (cout,), jnp.float32, -bound, bound)
        return w, b

    ks = jax.random.split(key, 4)
    p = {}
    p["w_in"], p["b_in"] = conv_init(ks[0], 3, 3, in_channel, dim)
    p["w_real"], p["b_real"] = conv_init(ks[1], 3, 3, dim, dim)
    p["w_imag"], p["b_imag"] = conv_init(ks[2], 3, 3, dim, dim)
    p["w_out"], p["b_out"] = conv_init(ks[3], 1, 1, dim, dim)
    return p


# ----------------------------------------------------------------------------
# Pure-JAX reference (for correctness check)
# ----------------------------------------------------------------------------
def _ref_conv(x_nchw, w, b, leaky):
    w_oihw = jnp.transpose(w, (3, 2, 0, 1))
    ph, pw = w.shape[0] // 2, w.shape[1] // 2
    y = jax.lax.conv_general_dilated(
        x_nchw, w_oihw, (1, 1), ((ph, ph), (pw, pw)),
        dimension_numbers=("NCHW", "OIHW", "NCHW"),
        precision=jax.lax.Precision.HIGHEST)
    y = y + b[None, :, None, None]
    if leaky:
        y = jnp.where(y > 0, y, 0.01 * y)
    return y


def fourier_conv_reference(x_nchw, p):
    _, _, H, W = x_nchw.shape
    skip = _ref_conv(x_nchw, p["w_in"], p["b_in"], True)
    xf = jnp.fft.rfft2(x_nchw, s=(H, W), axes=(-2, -1))
    real = _ref_conv(jnp.real(xf), p["w_real"], p["b_real"], True)
    imag = _ref_conv(jnp.imag(xf), p["w_imag"], p["b_imag"], True)
    rec = jnp.fft.irfft2(jax.lax.complex(real, imag), s=(H, W), axes=(-2, -1))
    return _ref_conv(rec.astype(jnp.float32) + skip, p["w_out"], p["b_out"], False)


if __name__ == "__main__":
    key = jax.random.PRNGKey(0)
    k_x, k_p = jax.random.split(key)

    # N=4 so both the lane-batched path (b_tile=2, 512 lanes/step) and the
    # 2-step "parallel" grid (v7x: both TensorCores) are actually exercised.
    N, H, W = 4, 16, 16
    in_channel = dim = 4   # FourierConv is only shape-consistent when equal

    params = init_params(k_p, in_channel, dim)
    x = jax.random.normal(k_x, (N, in_channel, H, W), jnp.float32)

    fwd = jax.jit(fourier_conv_forward)
    out = jax.block_until_ready(fwd(x, params))
    assert out.shape == (N, dim, H, W), out.shape

    ref = fourier_conv_reference(x, params)
    err = float(jnp.max(jnp.abs(out - ref)))
    assert err < 1e-2, f"max abs err vs reference: {err}"

    print("KERNEL_OK")
</pallas_src>

<mosaic_0001>
module attributes {stable_mosaic.version = 11 : i64} {
  func.func @kernel(%arg0: i32, %arg1: memref<1x4x512xf32, #tpu.memory_space<vmem>>, %arg2: memref<9x512xf32, #tpu.memory_space<vmem>>, %arg3: memref<9x4x4xf32, #tpu.memory_space<vmem>>, %arg4: memref<4x1xf32, #tpu.memory_space<vmem>>, %arg5: memref<1x4x512xf32, #tpu.memory_space<vmem>>) attributes {dimension_semantics = [#tpu.dimension_semantics<parallel>], iteration_bounds = array<i64: 2>, scalar_prefetch = 0 : i64, scratch_operands = 0 : i64, tpu.core_type = #tpu.core_type<tc>, window_params = [{transform_indices = @transform_0, window_bounds = array<i64: 1, 4, 512>}, {pipeline_mode = #tpu.pipeline_mode<synchronous>, transform_indices = @transform_1, window_bounds = array<i64: 9, 512>}, {pipeline_mode = #tpu.pipeline_mode<synchronous>, transform_indices = @transform_2, window_bounds = array<i64: 9, 4, 4>}, {pipeline_mode = #tpu.pipeline_mode<synchronous>, transform_indices = @transform_3, window_bounds = array<i64: 4, 1>}, {transform_indices = @transform_4, window_bounds = array<i64: 1, 4, 512>}]} {
    %c0 = arith.constant 0 : index
    %c0_0 = arith.constant 0 : index
    %c0_1 = arith.constant 0 : index
    %0 = vector.load %arg1[%c0, %c0_0, %c0_1] : memref<1x4x512xf32, #tpu.memory_space<vmem>>, vector<1x4x512xf32>
    %1 = vector.shape_cast %0 : vector<1x4x512xf32> to vector<4x512xf32>
    %cst = arith.constant 0.000000e+00 : f32
    %2 = vector.broadcast %cst : f32 to vector<4x17xf32>
    %3 = tpu.concatenate %2, %1, %2 in 1 : vector<4x17xf32>, vector<4x512xf32>, vector<4x17xf32> -> vector<4x546xf32>
    %4 = vector.extract_strided_slice %3 {offsets = [0, 0], sizes = [4, 512], strides = [1, 1]} : vector<4x546xf32> to vector<4x512xf32>
    %c0_2 = arith.constant 0 : index
    %c0_3 = arith.constant 0 : index
    %5 = vector.load %arg2[%c0_2, %c0_3] : memref<9x512xf32, #tpu.memory_space<vmem>>, vector<1x512xf32>
    %6 = vector.broadcast %5 : vector<1x512xf32> to vector<4x512xf32>
    %7 = arith.mulf %4, %6 : vector<4x512xf32>
    %c0_4 = arith.constant 0 : index
    %c0_5 = arith.constant 0 : index
    %c0_6 = arith.constant 0 : index
    %8 = vector.load %arg3[%c0_4, %c0_5, %c0_6] : memref<9x4x4xf32, #tpu.memory_space<vmem>>, vector<1x4x4xf32>
    %9 = vector.shape_cast %8 : vector<1x4x4xf32> to vector<4x4xf32>
    %cst_7 = arith.constant dense<0.000000e+00> : vector<4x512xf32>
    %10 = tpu.matmul %9, %7, %cst_7 {dimension_numbers = #tpu.dot_dimension_numbers<[1], [0], [0], [1], [0, 0, 1, 1], [], []>} : vector<4x4xf32>, vector<4x512xf32>, vector<4x512xf32> -> vector<4x512xf32>
    %11 = vector.extract_strided_slice %3 {offsets = [0, 1], sizes = [4, 512], strides = [1, 1]} : vector<4x546xf32> to vector<4x512xf32>
    %c1 = arith.constant 1 : index
    %c0_8 = arith.constant 0 : index
    %12 = vector.load %arg2[%c1, %c0_8] : memref<9x512xf32, #tpu.memory_space<vmem>>, vector<1x512xf32>
    %13 = vector.broadcast %12 : vector<1x512xf32> to vector<4x512xf32>
    %14 = arith.mulf %11, %13 : vector<4x512xf32>
    %c1_9 = arith.constant 1 : index
    %c0_10 = arith.constant 0 : index
    %c0_11 = arith.constant 0 : index
    %15 = vector.load %arg3[%c1_9, %c0_10, %c0_11] : memref<9x4x4xf32, #tpu.memory_space<vmem>>, vector<1x4x4xf32>
    %16 = vector.shape_cast %15 : vector<1x4x4xf32> to vector<4x4xf32>
    %cst_12 = arith.constant dense<0.000000e+00> : vector<4x512xf32>
    %17 = tpu.matmul %16, %14, %cst_12 {dimension_numbers = #tpu.dot_dimension_numbers<[1], [0], [0], [1], [0, 0, 1, 1], [], []>} : vector<4x4xf32>, vector<4x512xf32>, vector<4x512xf32> -> vector<4x512xf32>
    %18 = arith.addf %10, %17 : vector<4x512xf32>
    %19 = vector.extract_strided_slice %3 {offsets = [0, 2], sizes = [4, 512], strides = [1, 1]} : vector<4x546xf32> to vector<4x512xf32>
    %c2 = arith.constant 2 : index
    %c0_13 = arith.constant 0 : index
    %20 = vector.load %arg2[%c2, %c0_13] : memref<9x512xf32, #tpu.memory_space<vmem>>, vector<1x512xf32>
    %21 = vector.broadcast %20 : vector<1x512xf32> to vector<4x512xf32>
    %22 = arith.mulf %19, %21 : vector<4x512xf32>
    %c2_14 = arith.constant 2 : index
    %c0_15 = arith.constant 0 : index
    %c0_16 = arith.constant 0 : index
    %23 = vector.load %arg3[%c2_14, %c0_15, %c0_16] : memref<9x4x4xf32, #tpu.memory_space<vmem>>, vector<1x4x4xf32>
    %24 = vector.shape_cast %23 : vector<1x4x4xf32> to vector<4x4xf32>
    %cst_17 = arith.constant dense<0.000000e+00> : vector<4x512xf32>
    %25 = tpu.matmul %24, %22, %cst_17 {dimension_numbers = #tpu.dot_dimension_numbers<[1], [0], [0], [1], [0, 0, 1, 1], [], []>} : vector<4x4xf32>, vector<4x512xf32>, vector<4x512xf32> -> vector<4x512xf32>
    %26 = arith.addf %18, %25 : vector<4x512xf32>
    %27 = vector.extract_strided_slice %3 {offsets = [0, 16], sizes = [4, 512], strides = [1, 1]} : vector<4x546xf32> to vector<4x512xf32>
    %c3 = arith.constant 3 : index
    %c0_18 = arith.constant 0 : index
    %28 = vector.load %arg2[%c3, %c0_18] : memref<9x512xf32, #tpu.memory_space<vmem>>, vector<1x512xf32>
    %29 = vector.broadcast %28 : vector<1x512xf32> to vector<4x512xf32>
    %30 = arith.mulf %27, %29 : vector<4x512xf32>
    %c3_19 = arith.constant 3 : index
    %c0_20 = arith.constant 0 : index
    %c0_21 = arith.constant 0 : index
    %31 = vector.load %arg3[%c3_19, %c0_20, %c0_21] : memref<9x4x4xf32, #tpu.memory_space<vmem>>, vector<1x4x4xf32>
    %32 = vector.shape_cast %31 : vector<1x4x4xf32> to vector<4x4xf32>
    %cst_22 = arith.constant dense<0.000000e+00> : vector<4x512xf32>
    %33 = tpu.matmul %32, %30, %cst_22 {dimension_numbers = #tpu.dot_dimension_numbers<[1], [0], [0], [1], [0, 0, 1, 1], [], []>} : vector<4x4xf32>, vector<4x512xf32>, vector<4x512xf32> -> vector<4x512xf32>
    %34 = arith.addf %26, %33 : vector<4x512xf32>
    %c4 = arith.constant 4 : index
    %c0_23 = arith.constant 0 : index
    %c0_24 = arith.constant 0 : index
    %35 = vector.load %arg3[%c4, %c0_23, %c0_24] : memref<9x4x4xf32, #tpu.memory_space<vmem>>, vector<1x4x4xf32>
    %36 = vector.shape_cast %35 : vector<1x4x4xf32> to vector<4x4xf32>
    %cst_25 = arith.constant dense<0.000000e+00> : vector<4x512xf32>
    %37 = tpu.matmul %36, %1, %cst_25 {dimension_numbers = #tpu.dot_dimension_numbers<[1], [0], [0], [1], [0, 0, 1, 1], [], []>} : vector<4x4xf32>, vector<4x512xf32>, vector<4x512xf32> -> vector<4x512xf32>
    %38 = arith.addf %34, %37 : vector<4x512xf32>
    %39 = vector.extract_strided_slice %3 {offsets = [0, 18], sizes = [4, 512], strides = [1, 1]} : vector<4x546xf32> to vector<4x512xf32>
    %c5 = arith.constant 5 : index
    %c0_26 = arith.constant 0 : index
    %40 = vector.load %arg2[%c5, %c0_26] : memref<9x512xf32, #tpu.memory_space<vmem>>, vector<1x512xf32>
    %41 = vector.broadcast %40 : vector<1x512xf32> to vector<4x512xf32>
    %42 = arith.mulf %39, %41 : vector<4x512xf32>
    %c5_27 = arith.constant 5 : index
    %c0_28 = arith.constant 0 : index
    %c0_29 = arith.constant 0 : index
    %43 = vector.load %arg3[%c5_27, %c0_28, %c0_29] : memref<9x4x4xf32, #tpu.memory_space<vmem>>, vector<1x4x4xf32>
    %44 = vector.shape_cast %43 : vector<1x4x4xf32> to vector<4x4xf32>
    %cst_30 = arith.constant dense<0.000000e+00> : vector<4x512xf32>
    %45 = tpu.matmul %44, %42, %cst_30 {dimension_numbers = #tpu.dot_dimension_numbers<[1], [0], [0], [1], [0, 0, 1, 1], [], []>} : vector<4x4xf32>, vector<4x512xf32>, vector<4x512xf32> -> vector<4x512xf32>
    %46 = arith.addf %38, %45 : vector<4x512xf32>
    %47 = vector.extract_strided_slice %3 {offsets = [0, 32], sizes = [4, 512], strides = [1, 1]} : vector<4x546xf32> to vector<4x512xf32>
    %c6 = arith.constant 6 : index
    %c0_31 = arith.constant 0 : index
    %48 = vector.load %arg2[%c6, %c0_31] : memref<9x512xf32, #tpu.memory_space<vmem>>, vector<1x512xf32>
    %49 = vector.broadcast %48 : vector<1x512xf32> to vector<4x512xf32>
    %50 = arith.mulf %47, %49 : vector<4x512xf32>
    %c6_32 = arith.constant 6 : index
    %c0_33 = arith.constant 0 : index
    %c0_34 = arith.constant 0 : index
    %51 = vector.load %arg3[%c6_32, %c0_33, %c0_34] : memref<9x4x4xf32, #tpu.memory_space<vmem>>, vector<1x4x4xf32>
    %52 = vector.shape_cast %51 : vector<1x4x4xf32> to vector<4x4xf32>
    %cst_35 = arith.constant dense<0.000000e+00> : vector<4x512xf32>
    %53 = tpu.matmul %52, %50, %cst_35 {dimension_numbers = #tpu.dot_dimension_numbers<[1], [0], [0], [1], [0, 0, 1, 1], [], []>} : vector<4x4xf32>, vector<4x512xf32>, vector<4x512xf32> -> vector<4x512xf32>
    %54 = arith.addf %46, %53 : vector<4x512xf32>
    %55 = vector.extract_strided_slice %3 {offsets = [0, 33], sizes = [4, 512], strides = [1, 1]} : vector<4x546xf32> to vector<4x512xf32>
    %c7 = arith.constant 7 : index
    %c0_36 = arith.constant 0 : index
    %56 = vector.load %arg2[%c7, %c0_36] : memref<9x512xf32, #tpu.memory_space<vmem>>, vector<1x512xf32>
    %57 = vector.broadcast %56 : vector<1x512xf32> to vector<4x512xf32>
    %58 = arith.mulf %55, %57 : vector<4x512xf32>
    %c7_37 = arith.constant 7 : index
    %c0_38 = arith.constant 0 : index
    %c0_39 = arith.constant 0 : index
    %59 = vector.load %arg3[%c7_37, %c0_38, %c0_39] : memref<9x4x4xf32, #tpu.memory_space<vmem>>, vector<1x4x4xf32>
    %60 = vector.shape_cast %59 : vector<1x4x4xf32> to vector<4x4xf32>
    %cst_40 = arith.constant dense<0.000000e+00> : vector<4x512xf32>
    %61 = tpu.matmul %60, %58, %cst_40 {dimension_numbers = #tpu.dot_dimension_numbers<[1], [0], [0], [1], [0, 0, 1, 1], [], []>} : vector<4x4xf32>, vector<4x512xf32>, vector<4x512xf32> -> vector<4x512xf32>
    %62 = arith.addf %54, %61 : vector<4x512xf32>
    %63 = vector.extract_strided_slice %3 {offsets = [0, 34], sizes = [4, 512], strides = [1, 1]} : vector<4x546xf32> to vector<4x512xf32>
    %c8 = arith.constant 8 : index
    %c0_41 = arith.constant 0 : index
    %64 = vector.load %arg2[%c8, %c0_41] : memref<9x512xf32, #tpu.memory_space<vmem>>, vector<1x512xf32>
    %65 = vector.broadcast %64 : vector<1x512xf32> to vector<4x512xf32>
    %66 = arith.mulf %63, %65 : vector<4x512xf32>
    %c8_42 = arith.constant 8 : index
    %c0_43 = arith.constant 0 : index
    %c0_44 = arith.constant 0 : index
    %67 = vector.load %arg3[%c8_42, %c0_43, %c0_44] : memref<9x4x4xf32, #tpu.memory_space<vmem>>, vector<1x4x4xf32>
    %68 = vector.shape_cast %67 : vector<1x4x4xf32> to vector<4x4xf32>
    %cst_45 = arith.constant dense<0.000000e+00> : vector<4x512xf32>
    %69 = tpu.matmul %68, %66, %cst_45 {dimension_numbers = #tpu.dot_dimension_numbers<[1], [0], [0], [1], [0, 0, 1, 1], [], []>} : vector<4x4xf32>, vector<4x512xf32>, vector<4x512xf32> -> vector<4x512xf32>
    %70 = arith.addf %62, %69 : vector<4x512xf32>
    %c0_46 = arith.constant 0 : index
    %c0_47 = arith.constant 0 : index
    %71 = vector.load %arg4[%c0_46, %c0_47] : memref<4x1xf32, #tpu.memory_space<vmem>>, vector<4x1xf32>
    %72 = vector.broadcast %71 : vector<4x1xf32> to vector<4x512xf32>
    %73 = arith.addf %70, %72 : vector<4x512xf32>
    %cst_48 = arith.constant 0.000000e+00 : f32
    %74 = vector.broadcast %cst_48 : f32 to vector<4x512xf32>
    %75 = arith.cmpf ogt, %73, %74 : vector<4x512xf32>
    %cst_49 = arith.constant 0.00999999977 : f32
    %76 = vector.broadcast %cst_49 : f32 to vector<4x512xf32>
    %77 = arith.mulf %76, %73 : vector<4x512xf32>
    %78 = arith.select %75, %73, %77 : vector<4x512xi1>, vector<4x512xf32>
    %c0_50 = arith.constant 0 : index
    %c0_51 = arith.constant 0 : index
    %c0_52 = arith.constant 0 : index
    %79 = vector.load %arg5[%c0_50, %c0_51, %c0_52] : memref<1x4x512xf32, #tpu.memory_space<vmem>>, vector<1x4x512xf32>
    %80 = vector.shape_cast %79 : vector<1x4x512xf32> to vector<4x512xf32>
    %81 = vector.shape_cast %78 : vector<4x512xf32> to vector<1x4x512xf32>
    tpu.vector_store %arg5[%c0_50, %c0_51, %c0_52], %81 {strides = array<i32>} : memref<1x4x512xf32, #tpu.memory_space<vmem>>, vector<1x4x512xf32>,
    return
  }
  func.func @transform_0(%arg0: i32) -> (i32, i32, i32) {
    %c0_i32 = arith.constant 0 : i32
    %c0_i32_0 = arith.constant 0 : i32
    %c0_i32_1 = arith.constant 0 : i32
    return %arg0, %c0_i32, %c0_i32_0 : i32, i32, i32
  }
  func.func @transform_1(%arg0: i32) -> (i32, i32) {
    %c0_i32 = arith.constant 0 : i32
    %c0_i32_0 = arith.constant 0 : i32
    %c0_i32_1 = arith.constant 0 : i32
    return %c0_i32, %c0_i32_0 : i32, i32
  }
  func.func @transform_2(%arg0: i32) -> (i32, i32, i32) {
    %c0_i32 = arith.constant 0 : i32
    %c0_i32_0 = arith.constant 0 : i32
    %c0_i32_1 = arith.constant 0 : i32
    %c0_i32_2 = arith.constant 0 : i32
    return %c0_i32, %c0_i32_0, %c0_i32_1 : i32, i32, i32
  }
  func.func @transform_3(%arg0: i32) -> (i32, i32) {
    %c0_i32 = arith.constant 0 : i32
    %c0_i32_0 = arith.constant 0 : i32
    %c0_i32_1 = arith.constant 0 : i32
    return %c0_i32, %c0_i32_0 : i32, i32
  }
  func.func @transform_4(%arg0: i32) -> (i32, i32, i32) {
    %c0_i32 = arith.constant 0 : i32
    %c0_i32_0 = arith.constant 0 : i32
    %c0_i32_1 = arith.constant 0 : i32
    return %arg0, %c0_i32, %c0_i32_0 : i32, i32, i32
  }
}

module attributes {stable_mosaic.version = 11 : i64} {
  func.func @kernel(%arg0: i32, %arg1: memref<1x4x512xf32, #tpu.memory_space<vmem>>, %arg2: memref<1x4x512xf32, #tpu.memory_space<vmem>>, %arg3: memref<1x4x4xf32, #tpu.memory_space<vmem>>, %arg4: memref<4x1xf32, #tpu.memory_space<vmem>>, %arg5: memref<1x4x512xf32, #tpu.memory_space<vmem>>) attributes {dimension_semantics = [#tpu.dimension_semantics<parallel>], iteration_bounds = array<i64: 2>, scalar_prefetch = 0 : i64, scratch_operands = 0 : i64, tpu.core_type = #tpu.core_type<tc>, window_params = [{transform_indices = @transform_0, window_bounds = array<i64: 1, 4, 512>}, {transform_indices = @transform_1, window_bounds = array<i64: 1, 4, 512>}, {pipeline_mode = #tpu.pipeline_mode<synchronous>, transform_indices = @transform_2, window_bounds = array<i64: 1, 4, 4>}, {pipeline_mode = #tpu.pipeline_mode<synchronous>, transform_indices = @transform_3, window_bounds = array<i64: 4, 1>}, {transform_indices = @transform_4, window_bounds = array<i64: 1, 4, 512>}]} {
    %c0 = arith.constant 0 : index
    %c0_0 = arith.constant 0 : index
    %c0_1 = arith.constant 0 : index
    %0 = vector.load %arg1[%c0, %c0_0, %c0_1] : memref<1x4x512xf32, #tpu.memory_space<vmem>>, vector<1x4x512xf32>
    %1 = vector.shape_cast %0 : vector<1x4x512xf32> to vector<4x512xf32>
    %c0_2 = arith.constant 0 : index
    %c0_3 = arith.constant 0 : index
    %c0_4 = arith.constant 0 : index
    %2 = vector.load %arg2[%c0_2, %c0_3, %c0_4] : memref<1x4x512xf32, #tpu.memory_space<vmem>>, vector<1x4x512xf32>
    %3 = vector.shape_cast %2 : vector<1x4x512xf32> to vector<4x512xf32>
    %4 = arith.addf %1, %3 : vector<4x512xf32>
    %c0_5 = arith.constant 0 : index
    %c0_6 = arith.constant 0 : index
    %c0_7 = arith.constant 0 : index
    %5 = vector.load %arg3[%c0_5, %c0_6, %c0_7] : memref<1x4x4xf32, #tpu.memory_space<vmem>>, vector<1x4x4xf32>
    %6 = vector.shape_cast %5 : vector<1x4x4xf32> to vector<4x4xf32>
    %cst = arith.constant dense<0.000000e+00> : vector<4x512xf32>
    %7 = tpu.matmul %6, %4, %cst {dimension_numbers = #tpu.dot_dimension_numbers<[1], [0], [0], [1], [0, 0, 1, 1], [], []>} : vector<4x4xf32>, vector<4x512xf32>, vector<4x512xf32> -> vector<4x512xf32>
    %c0_8 = arith.constant 0 : index
    %c0_9 = arith.constant 0 : index
    %8 = vector.load %arg4[%c0_8, %c0_9] : memref<4x1xf32, #tpu.memory_space<vmem>>, vector<4x1xf32>
    %9 = vector.broadcast %8 : vector<4x1xf32> to vector<4x512xf32>
    %10 = arith.addf %7, %9 : vector<4x512xf32>
    %c0_10 = arith.constant 0 : index
    %c0_11 = arith.constant 0 : index
    %c0_12 = arith.constant 0 : index
    %11 = vector.load %arg5[%c0_10, %c0_11, %c0_12] : memref<1x4x512xf32, #tpu.memory_space<vmem>>, vector<1x4x512xf32>
    %12 = vector.shape_cast %11 : vector<1x4x512xf32> to vector<4x512xf32>
    %13 = vector.shape_cast %10 : vector<4x512xf32> to vector<1x4x512xf32>
    tpu.vector_store %arg5[%c0_10, %c0_11, %c0_12], %13 {strides = array<i32>} : memref<1x4x512xf32, #tpu.memory_space<vmem>>, vector<1x4x512xf32>,
    return
  }
  func.func @transform_0(%arg0: i32) -> (i32, i32, i32) {
    %c0_i32 = arith.constant 0 : i32
    %c0_i32_0 = arith.constant 0 : i32
    %c0_i32_1 = arith.constant 0 : i32
    return %arg0, %c0_i32, %c0_i32_0 : i32, i32, i32
  }
  func.func @transform_1(%arg0: i32) -> (i32, i32, i32) {
    %c0_i32 = arith.constant 0 : i32
    %c0_i32_0 = arith.constant 0 : i32
    %c0_i32_1 = arith.constant 0 : i32
    return %arg0, %c0_i32, %c0_i32_0 : i32, i32, i32
  }
  func.func @transform_2(%arg0: i32) -> (i32, i32, i32) {
    %c0_i32 = arith.constant 0 : i32
    %c0_i32_0 = arith.constant 0 : i32
    %c0_i32_1 = arith.constant 0 : i32
    %c0_i32_2 = arith.constant 0 : i32
    return %c0_i32, %c0_i32_0, %c0_i32_1 : i32, i32, i32
  }
  func.func @transform_3(%arg0: i32) -> (i32, i32) {
    %c0_i32 = arith.constant 0 : i32
    %c0_i32_0 = arith.constant 0 : i32
    %c0_i32_1 = arith.constant 0 : i32
    return %c0_i32, %c0_i32_0 : i32, i32
  }
  func.func @transform_4(%arg0: i32) -> (i32, i32, i32) {
    %c0_i32 = arith.constant 0 : i32
    %c0_i32_0 = arith.constant 0 : i32
    %c0_i32_1 = arith.constant 0 : i32
    return %arg0, %c0_i32, %c0_i32_0 : i32, i32, i32
  }
}

</mosaic_0001>

<llo_original>
// kernel: reverse.0
$region0: #{reverse.0}
  %s0 = inlined_call_operand.vmem [shape: f32[4,4,16,7], index: 0, kind: input, shape index: {}]
  %s1 = inlined_call_operand.vmem [shape: f32[4,4,16,7], index: 1, kind: output, shape index: {}]
  $region1: #{reverse.0} parent=0
    #allocation0 [shape = 'u8[131072]{0}', space=vmem, size = 0x20000, scoped, tag = 'operand span for operand 0']
    #allocation1 [shape = 'u8[65536]{0}', space=vmem, size = 0x10000, scoped, tag = 'operand span for operand 1']
    %s2 = scalar_lea.vmem [#allocation0], 8
    // Predicated region
    $region2: #{reverse.0} parent=1 // pred_check
      _
    $region3: #{reverse.0} parent=1 // pred_check_branch
      %4 = sbr.rel (0) target = $region5
    $region4: #{reverse.0} parent=1 // pred_region
      // Predicated region
      $region6: #{reverse.0} parent=4 // pred_check
        _
      $region7: #{reverse.0} parent=4 // pred_check_branch
        %6 = sbr.rel (0) target = $region9
      $region8: #{reverse.0} parent=4 // pred_region
        // Predicated region
        $region21: #{reverse.0} parent=8 // pred_check
          _
        $region22: #{reverse.0} parent=8 // pred_check_branch
          %52 = sbr.rel (0) target = $region24
        $region23: #{reverse.0} parent=8 // pred_region
          loop: start=0, step=1, limit=1
          $region25: #{reverse.0} parent=23 // loop_pre_header
            _
          $region26: #{reverse.0} parent=23 // loop_header
            %s54 = sphi 0, %s58
            %p55 = scmp.ge.s32.totalorder %s54, 1
            %s59 = sphi %s0, %s0
            %s60 = sphi %s2, %s2
          $region27: #{reverse.0} parent=23 // loop_header_branch
            %57 = sbr.rel (%p55) target = $region31
          $region28: #{reverse.0} parent=23 // loop_body
            %v61 = vld [vmem:[%s59] sm:$0xff]
            %62 = vst [vmem:[%s60] sm:$0xff] %v61
            %v63 = vld [vmem:[%s59 + $0x8] sm:$0xff]
            %64 = vst [vmem:[%s60 + $0x10] sm:$0xff] %v63
            %v65 = vld [vmem:[%s59 + $0x10] sm:$0xff]
            %66 = vst [vmem:[%s60 + $0x20] sm:$0xff] %v65
            %v67 = vld [vmem:[%s59 + $0x18] sm:$0xff]
            %68 = vst [vmem:[%s60 + $0x30] sm:$0xff] %v67
            %v69 = vld [vmem:[%s59 + $0x20] sm:$0xff]
            %70 = vst [vmem:[%s60 + $0x40] sm:$0xff] %v69
            %v71 = vld [vmem:[%s59 + $0x28] sm:$0xff]
            %72 = vst [vmem:[%s60 + $0x50] sm:$0xff] %v71
            %v73 = vld [vmem:[%s59 + $0x30] sm:$0xff]
            %74 = vst [vmem:[%s60 + $0x60] sm:$0xff] %v73
            %v75 = vld [vmem:[%s59 + $0x38] sm:$0xff]
            %76 = vst [vmem:[%s60 + $0x70] sm:$0xff] %v75
            %v77 = vld [vmem:[%s59 + $0x40] sm:$0xff]
            %78 = vst [vmem:[%s60 + $0x80] sm:$0xff] %v77
            %v79 = vld [vmem:[%s59 + $0x48] sm:$0xff]
            %80 = vst [vmem:[%s60 + $0x90] sm:$0xff] %v79
            %v81 = vld [vmem:[%s59 + $0x50] sm:$0xff]
            %82 = vst [vmem:[%s60 + $0xa0] sm:$0xff] %v81
            %v83 = vld [vmem:[%s59 + $0x58] sm:$0xff]
            %84 = vst [vmem:[%s60 + $0xb0] sm:$0xff] %v83
            %v85 = vld [vmem:[%s59 + $0x60] sm:$0xff]
            %86 = vst [vmem:[%s60 + $0xc0] sm:$0xff] %v85
            %v87 = vld [vmem:[%s59 + $0x68] sm:$0xff]
            %88 = vst [vmem:[%s60 + $0xd0] sm:$0xff] %v87
            %v89 = vld [vmem:[%s59 + $0x70] sm:$0xff]
            %90 = vst [vmem:[%s60 + $0xe0] sm:$0xff] %v89
            %v91 = vld [vmem:[%s59 + $0x78] sm:$0xff]
            %92 = vst [vmem:[%s60 + $0xf0] sm:$0xff] %v91
          $region29: #{reverse.0} parent=23 // loop_footer
            %s58 = sadd.s32 1, %s54
          $region30: #{reverse.0} parent=23 // loop_footer_branch
            %53 = sbr.rel target = $region26
          $region31: #{reverse.0} parent=23 // loop_exit
            _
        $region24: #{reverse.0} parent=8 // pred_fallthru
          _
        // Predicated region
        $region32: #{reverse.0} parent=8 // pred_check
          _
        $region33: #{reverse.0} parent=8 // pred_check_branch
          %94 = sbr.rel target = $region35
        $region34: #{reverse.0} parent=8 // pred_region
          _
        $region35: #{reverse.0} parent=8 // pred_fallthru
          _
      $region9: #{reverse.0} parent=4 // pred_fallthru
        _
      // Predicated region
      $region10: #{reverse.0} parent=4 // pred_check
        _
      $region11: #{reverse.0} parent=4 // pred_check_branch
        %8 = sbr.rel target = $region13
      $region12: #{reverse.0} parent=4 // pred_region
        %s10 = ssub.s32 256, 1
        loop: start=0, step=1, limit=1
        $region14: #{reverse.0} parent=12 // loop_pre_header
          _
        $region15: #{reverse.0} parent=12 // loop_header
          %s12 = sphi 0, %s16
          %p13 = scmp.ge.s32.totalorder %s12, 1
          %s17 = sphi %s0, %s0
          %s18 = sphi %s2, %s2
        $region16: #{reverse.0} parent=12 // loop_header_branch
          %15 = sbr.rel (%p13) target = $region20
        $region17: #{reverse.0} parent=12 // loop_body
          %v19 = vld [vmem:[%s17] sm:%s10]
          %20 = vst [vmem:[%s18] sm:%s10] %v19
          %v21 = vld [vmem:[%s17 + $0x8] sm:%s10]
          %22 = vst [vmem:[%s18 + $0x10] sm:%s10] %v21
          %v23 = vld [vmem:[%s17 + $0x10] sm:%s10]
          %24 = vst [vmem:[%s18 + $0x20] sm:%s10] %v23
          %v25 = vld [vmem:[%s17 + $0x18] sm:%s10]
          %26 = vst [vmem:[%s18 + $0x30] sm:%s10] %v25
          %v27 = vld [vmem:[%s17 + $0x20] sm:%s10]
          %28 = vst [vmem:[%s18 + $0x40] sm:%s10] %v27
          %v29 = vld [vmem:[%s17 + $0x28] sm:%s10]
          %30 = vst [vmem:[%s18 + $0x50] sm:%s10] %v29
          %v31 = vld [vmem:[%s17 + $0x30] sm:%s10]
          %32 = vst [vmem:[%s18 + $0x60] sm:%s10] %v31
          %v33 = vld [vmem:[%s17 + $0x38] sm:%s10]
          %34 = vst [vmem:[%s18 + $0x70] sm:%s10] %v33
          %v35 = vld [vmem:[%s17 + $0x40] sm:%s10]
          %36 = vst [vmem:[%s18 + $0x80] sm:%s10] %v35
          %v37 = vld [vmem:[%s17 + $0x48] sm:%s10]
          %38 = vst [vmem:[%s18 + $0x90] sm:%s10] %v37
          %v39 = vld [vmem:[%s17 + $0x50] sm:%s10]
          %40 = vst [vmem:[%s18 + $0xa0] sm:%s10] %v39
          %v41 = vld [vmem:[%s17 + $0x58] sm:%s10]
          %42 = vst [vmem:[%s18 + $0xb0] sm:%s10] %v41
          %v43 = vld [vmem:[%s17 + $0x60] sm:%s10]
          %44 = vst [vmem:[%s18 + $0xc0] sm:%s10] %v43
          %v45 = vld [vmem:[%s17 + $0x68] sm:%s10]
          %46 = vst [vmem:[%s18 + $0xd0] sm:%s10] %v45
          %v47 = vld [vmem:[%s17 + $0x70] sm:%s10]
          %48 = vst [vmem:[%s18 + $0xe0] sm:%s10] %v47
          %v49 = vld [vmem:[%s17 + $0x78] sm:%s10]
          %50 = vst [vmem:[%s18 + $0xf0] sm:%s10] %v49
        $region18: #{reverse.0} parent=12 // loop_footer
          %s16 = sadd.s32 1, %s12
        $region19: #{reverse.0} parent=12 // loop_footer_branch
          %11 = sbr.rel target = $region15
        $region20: #{reverse.0} parent=12 // loop_exit
          _
      $region13: #{reverse.0} parent=4 // pred_fallthru
        _
    $region5: #{reverse.0} parent=1 // pred_fallthru
      _
    %95 = vnop
    %s96 = scalar_lea.vmem [#allocation0], 7
    %v97 = vld [vmem:[%s96] ss:$-1 sm:$0xff]
    %v98 = vrot.slane %v97, 1
    %99 = vst [vmem:[#allocation1] sm:$0xff] %v98
    %s100 = scalar_lea.vmem [#allocation0], 8
    %s101 = scalar_lea.vmem %s100, 7 [#allocation0]
    %v102 = vld [vmem:[%s101] ss:$-1 sm:$0xff]
    %v103 = vrot.slane %v102, 1
    %v104 = vlaneseq
    %v105 = vshrl.u32 %v104, 7
    %vm106 = vcmp.lt.s32.totalorder %v105, 7
    %107 = vst.msk [vmem:[#allocation1] sm:$0xff] %vm106, %v103
    %s108 = scalar_lea.vmem [#allocation1], 8
    %s109 = scalar_lea.vmem [#allocation0], 16
    %s110 = scalar_lea.vmem %s109, 7 [#allocation0]
    %v111 = vld [vmem:[%s110] ss:$-1 sm:$0xff]
    %v112 = vrot.slane %v111, 1
    %113 = vst [vmem:[%s108] sm:$0xff] %v112
    %s114 = scalar_lea.vmem %s109, 8 [#allocation0]
    %s115 = scalar_lea.vmem %s114, 7 [#allocation0]
    %v116 = vld [vmem:[%s115] ss:$-1 sm:$0xff]
    %v117 = vrot.slane %v116, 1
    %v118 = vlaneseq
    %v119 = vshrl.u32 %v118, 7
    %vm120 = vcmp.lt.s32.totalorder %v119, 7
    %121 = vst.msk [vmem:[%s108] sm:$0xff] %vm120, %v117
    %s122 = scalar_lea.vmem [#allocation1], 16
    %s123 = scalar_lea.vmem [#allocation0], 32
    %s124 = scalar_lea.vmem %s123, 7 [#allocation0]
    %v125 = vld [vmem:[%s124] ss:$-1 sm:$0xff]
    %v126 = vrot.slane %v125, 1
    %127 = vst [vmem:[%s122] sm:$0xff] %v126
    %s128 = scalar_lea.vmem %s123, 8 [#allocation0]
    %s129 = scalar_lea.vmem %s128, 7 [#allocation0]
    %v130 = vld [vmem:[%s129] ss:$-1 sm:$0xff]
    %v131 = vrot.slane %v130, 1
    %v132 = vlaneseq
    %v133 = vshrl.u32 %v132, 7
    %vm134 = vcmp.lt.s32.totalorder %v133, 7
    %135 = vst.msk [vmem:[%s122] sm:$0xff] %vm134, %v131
    %s136 = scalar_lea.vmem [#allocation1], 24
    %s137 = scalar_lea.vmem [#allocation0], 48
    %s138 = scalar_lea.vmem %s137, 7 [#allocation0]
    %v139 = vld [vmem:[%s138] ss:$-1 sm:$0xff]
    %v140 = vrot.slane %v139, 1
    %141 = vst [vmem:[%s136] sm:$0xff] %v140
    %s142 = scalar_lea.vmem %s137, 8 [#allocation0]
    %s143 = scalar_lea.vmem %s142, 7 [#allocation0]
    %v144 = vld [vmem:[%s143] ss:$-1 sm:$0xff]
    %v145 = vrot.slane %v144, 1
    %v146 = vlaneseq
    %v147 = vshrl.u32 %v146, 7
    %vm148 = vcmp.lt.s32.totalorder %v147, 7
    %149 = vst.msk [vmem:[%s136] sm:$0xff] %vm148, %v145
    %s150 = scalar_lea.vmem [#allocation1], 32
    %s151 = scalar_lea.vmem [#allocation0], 64
    %s152 = scalar_lea.vmem %s151, 7 [#allocation0]
    %v153 = vld [vmem:[%s152] ss:$-1 sm:$0xff]
    %v154 = vrot.slane %v153, 1
    %155 = vst [vmem:[%s150] sm:$0xff] %v154
    %s156 = scalar_lea.vmem %s151, 8 [#allocation0]
    %s157 = scalar_lea.vmem %s156, 7 [#allocation0]
    %v158 = vld [vmem:[%s157] ss:$-1 sm:$0xff]
    %v159 = vrot.slane %v158, 1
    %v160 = vlaneseq
    %v161 = vshrl.u32 %v160, 7
    %vm162 = vcmp.lt.s32.totalorder %v161, 7
    %163 = vst.msk [vmem:[%s150] sm:$0xff] %vm162, %v159
    %s164 = scalar_lea.vmem [#allocation1], 40
    %s165 = scalar_lea.vmem [#allocation0], 80
    %s166 = scalar_lea.vmem %s165, 7 [#allocation0]
    %v167 = vld [vmem:[%s166] ss:$-1 sm:$0xff]
    %v168 = vrot.slane %v167, 1
    %169 = vst [vmem:[%s164] sm:$0xff] %v168
    %s170 = scalar_lea.vmem %s165, 8 [#allocation0]
    %s171 = scalar_lea.vmem %s170, 7 [#allocation0]
    %v172 = vld [vmem:[%s171] ss:$-1 sm:$0xff]
    %v173 = vrot.slane %v172, 1
    %v174 = vlaneseq
    %v175 = vshrl.u32 %v174, 7
    %vm176 = vcmp.lt.s32.totalorder %v175, 7
    %177 = vst.msk [vmem:[%s164] sm:$0xff] %vm176, %v173
    %s178 = scalar_lea.vmem [#allocation1], 48
    %s179 = scalar_lea.vmem [#allocation0], 96
    %s180 = scalar_lea.vmem %s179, 7 [#allocation0]
    %v181 = vld [vmem:[%s180] ss:$-1 sm:$0xff]
    %v182 = vrot.slane %v181, 1
    %183 = vst [vmem:[%s178] sm:$0xff] %v182
    %s184 = scalar_lea.vmem %s179, 8 [#allocation0]
    %s185 = scalar_lea.vmem %s184, 7 [#allocation0]
    %v186 = vld [vmem:[%s185] ss:$-1 sm:$0xff]
    %v187 = vrot.slane %v186, 1
    %v188 = vlaneseq
    %v189 = vshrl.u32 %v188, 7
    %vm190 = vcmp.lt.s32.totalorder %v189, 7
    %191 = vst.msk [vmem:[%s178] sm:$0xff] %vm190, %v187
    %s192 = scalar_lea.vmem [#allocation1], 56
    %s193 = scalar_lea.vmem [#allocation0], 112
    %s194 = scalar_lea.vmem %s193, 7 [#allocation0]
    %v195 = vld [vmem:[%s194] ss:$-1 sm:$0xff]
    %v196 = vrot.slane %v195, 1
    %197 = vst [vmem:[%s192] sm:$0xff] %v196
    %s198 = scalar_lea.vmem %s193, 8 [#allocation0]
    %s199 = scalar_lea.vmem %s198, 7 [#allocation0]
    %v200 = vld [vmem:[%s199] ss:$-1 sm:$0xff]
    %v201 = vrot.slane %v200, 1
    %v202 = vlaneseq
    %v203 = vshrl.u32 %v202, 7
    %vm204 = vcmp.lt.s32.totalorder %v203, 7
    %205 = vst.msk [vmem:[%s192] sm:$0xff] %vm204, %v201
    %s206 = scalar_lea.vmem [#allocation1], 64
    %s207 = scalar_lea.vmem [#allocation0], 128
    %s208 = scalar_lea.vmem %s207, 7 [#allocation0]
    %v209 = vld [vmem:[%s208] ss:$-1 sm:$0xff]
    %v210 = vrot.slane %v209, 1
    %211 = vst [vmem:[%s206] sm:$0xff] %v210
    %s212 = scalar_lea.vmem %s207, 8 [#allocation0]
    %s213 = scalar_lea.vmem %s212, 7 [#allocation0]
    %v214 = vld [vmem:[%s213] ss:$-1 sm:$0xff]
    %v215 = vrot.slane %v214, 1
    %v216 = vlaneseq
    %v217 = vshrl.u32 %v216, 7
    %vm218 = vcmp.lt.s32.totalorder %v217, 7
    %219 = vst.msk [vmem:[%s206] sm:$0xff] %vm218, %v215
    %s220 = scalar_lea.vmem [#allocation1], 72
    %s221 = scalar_lea.vmem [#allocation0], 144
    %s222 = scalar_lea.vmem %s221, 7 [#allocation0]
    %v223 = vld [vmem:[%s222] ss:$-1 sm:$0xff]
    %v224 = vrot.slane %v223, 1
    %225 = vst [vmem:[%s220] sm:$0xff] %v224
    %s226 = scalar_lea.vmem %s221, 8 [#allocation0]
    %s227 = scalar_lea.vmem %s226, 7 [#allocation0]
    %v228 = vld [vmem:[%s227] ss:$-1 sm:$0xff]
    %v229 = vrot.slane %v228, 1
    %v230 = vlaneseq
    %v231 = vshrl.u32 %v230, 7
    %vm232 = vcmp.lt.s32.totalorder %v231, 7
    %233 = vst.msk [vmem:[%s220] sm:$0xff] %vm232, %v229
    %s234 = scalar_lea.vmem [#allocation1], 80
    %s235 = scalar_lea.vmem [#allocation0], 160
    %s236 = scalar_lea.vmem %s235, 7 [#allocation0]
    %v237 = vld [vmem:[%s236] ss:$-1 sm:$0xff]
    %v238 = vrot.slane %v237, 1
    %239 = vst [vmem:[%s234] sm:$0xff] %v238
    %s240 = scalar_lea.vmem %s235, 8 [#allocation0]
    %s241 = scalar_lea.vmem %s240, 7 [#allocation0]
    %v242 = vld [vmem:[%s241] ss:$-1 sm:$0xff]
    %v243 = vrot.slane %v242, 1
    %v244 = vlaneseq
    %v245 = vshrl.u32 %v244, 7
    %vm246 = vcmp.lt.s32.totalorder %v245, 7
    %247 = vst.msk [vmem:[%s234] sm:$0xff] %vm246, %v243
    %s248 = scalar_lea.vmem [#allocation1], 88
    %s249 = scalar_lea.vmem [#allocation0], 176
    %s250 = scalar_lea.vmem %s249, 7 [#allocation0]
    %v251 = vld [vmem:[%s250] ss:$-1 sm:$0xff]
    %v252 = vrot.slane %v251, 1
    %253 = vst [vmem:[%s248] sm:$0xff] %v252
    %s254 = scalar_lea.vmem %s249, 8 [#allocation0]
    %s255 = scalar_lea.vmem %s254, 7 [#allocation0]
    %v256 = vld [vmem:[%s255] ss:$-1 sm:$0xff]
    %v257 = vrot.slane %v256, 1
    %v258 = vlaneseq
    %v259 = vshrl.u32 %v258, 7
    %vm260 = vcmp.lt.s32.totalorder %v259, 7
    %261 = vst.msk [vmem:[%s248] sm:$0xff] %vm260, %v257
    %s262 = scalar_lea.vmem [#allocation1], 96
    %s263 = scalar_lea.vmem [#allocation0], 192
    %s264 = scalar_lea.vmem %s263, 7 [#allocation0]
    %v265 = vld [vmem:[%s264] ss:$-1 sm:$0xff]
    %v266 = vrot.slane %v265, 1
    %267 = vst [vmem:[%s262] sm:$0xff] %v266
    %s268 = scalar_lea.vmem %s263, 8 [#allocation0]
    %s269 = scalar_lea.vmem %s268, 7 [#allocation0]
    %v270 = vld [vmem:[%s269] ss:$-1 sm:$0xff]
    %v271 = vrot.slane %v270, 1
    %v272 = vlaneseq
    %v273 = vshrl.u32 %v272, 7
    %vm274 = vcmp.lt.s32.totalorder %v273, 7
    %275 = vst.msk [vmem:[%s262] sm:$0xff] %vm274, %v271
    %s276 = scalar_lea.vmem [#allocation1], 104
    %s277 = scalar_lea.vmem [#allocation0], 208
    %s278 = scalar_lea.vmem %s277, 7 [#allocation0]
    %v279 = vld [vmem:[%s278] ss:$-1 sm:$0xff]
    %v280 = vrot.slane %v279, 1
    %281 = vst [vmem:[%s276] sm:$0xff] %v280
    %s282 = scalar_lea.vmem %s277, 8 [#allocation0]
    %s283 = scalar_lea.vmem %s282, 7 [#allocation0]
    %v284 = vld [vmem:[%s283] ss:$-1 sm:$0xff]
    %v285 = vrot.slane %v284, 1
    %v286 = vlaneseq
    %v287 = vshrl.u32 %v286, 7
    %vm288 = vcmp.lt.s32.totalorder %v287, 7
    %289 = vst.msk [vmem:[%s276] sm:$0xff] %vm288, %v285
    %s290 = scalar_lea.vmem [#allocation1], 112
    %s291 = scalar_lea.vmem [#allocation0], 224
    %s292 = scalar_lea.vmem %s291, 7 [#allocation0]
    %v293 = vld [vmem:[%s292] ss:$-1 sm:$0xff]
    %v294 = vrot.slane %v293, 1
    %295 = vst [vmem:[%s290] sm:$0xff] %v294
    %s296 = scalar_lea.vmem %s291, 8 [#allocation0]
    %s297 = scalar_lea.vmem %s296, 7 [#allocation0]
    %v298 = vld [vmem:[%s297] ss:$-1 sm:$0xff]
    %v299 = vrot.slane %v298, 1
    %v300 = vlaneseq
    %v301 = vshrl.u32 %v300, 7
    %vm302 = vcmp.lt.s32.totalorder %v301, 7
    %303 = vst.msk [vmem:[%s290] sm:$0xff] %vm302, %v299
    %s304 = scalar_lea.vmem [#allocation1], 120
    %s305 = scalar_lea.vmem [#allocation0], 240
    %s306 = scalar_lea.vmem %s305, 7 [#allocation0]
    %v307 = vld [vmem:[%s306] ss:$-1 sm:$0xff]
    %v308 = vrot.slane %v307, 1
    %309 = vst [vmem:[%s304] sm:$0xff] %v308
    %s310 = scalar_lea.vmem %s305, 8 [#allocation0]
    %s311 = scalar_lea.vmem %s310, 7 [#allocation0]
    %v312 = vld [vmem:[%s311] ss:$-1 sm:$0xff]
    %v313 = vrot.slane %v312, 1
    %v314 = vlaneseq
    %v315 = vshrl.u32 %v314, 7
    %vm316 = vcmp.lt.s32.totalorder %v315, 7
    %317 = vst.msk [vmem:[%s304] sm:$0xff] %vm316, %v313
    // Predicated region
    $region36: #{reverse.0} parent=1 // pred_check
      _
    $region37: #{reverse.0} parent=1 // pred_check_branch
      %319 = sbr.rel (0) target = $region39
    $region38: #{reverse.0} parent=1 // pred_region
      // Predicated region
      $region40: #{reverse.0} parent=38 // pred_check
        _
      $region41: #{reverse.0} parent=38 // pred_check_branch
        %321 = sbr.rel (0) target = $region43
      $region42: #{reverse.0} parent=38 // pred_region
        // Predicated region
        $region55: #{reverse.0} parent=42 // pred_check
          _
        $region56: #{reverse.0} parent=42 // pred_check_branch
          %367 = sbr.rel (0) target = $region58
        $region57: #{reverse.0} parent=42 // pred_region
          loop: start=0, step=1, limit=1
          $region59: #{reverse.0} parent=57 // loop_pre_header
            _
          $region60: #{reverse.0} parent=57 // loop_header
            %s369 = sphi 0, %s373
            %p370 = scmp.ge.s32.totalorder %s369, 1
            %s374 = sphi [#allocation1], [#allocation1]
            %s375 = sphi %s1, %s1
          $region61: #{reverse.0} parent=57 // loop_header_branch
            %372 = sbr.rel (%p370) target = $region65
          $region62: #{reverse.0} parent=57 // loop_body
            %v376 = vld [vmem:[%s374] sm:$0xff]
            %377 = vst [vmem:[%s375] sm:$0xff] %v376
            %v378 = vld [vmem:[%s374 + $0x8] sm:$0xff]
            %379 = vst [vmem:[%s375 + $0x8] sm:$0xff] %v378
            %v380 = vld [vmem:[%s374 + $0x10] sm:$0xff]
            %381 = vst [vmem:[%s375 + $0x10] sm:$0xff] %v380
            %v382 = vld [vmem:[%s374 + $0x18] sm:$0xff]
            %383 = vst [vmem:[%s375 + $0x18] sm:$0xff] %v382
            %v384 = vld [vmem:[%s374 + $0x20] sm:$0xff]
            %385 = vst [vmem:[%s375 + $0x20] sm:$0xff] %v384
            %v386 = vld [vmem:[%s374 + $0x28] sm:$0xff]
            %387 = vst [vmem:[%s375 + $0x28] sm:$0xff] %v386
            %v388 = vld [vmem:[%s374 + $0x30] sm:$0xff]
            %389 = vst [vmem:[%s375 + $0x30] sm:$0xff] %v388
            %v390 = vld [vmem:[%s374 + $0x38] sm:$0xff]
            %391 = vst [vmem:[%s375 + $0x38] sm:$0xff] %v390
            %v392 = vld [vmem:[%s374 + $0x40] sm:$0xff]
            %393 = vst [vmem:[%s375 + $0x40] sm:$0xff] %v392
            %v394 = vld [vmem:[%s374 + $0x48] sm:$0xff]
            %395 = vst [vmem:[%s375 + $0x48] sm:$0xff] %v394
            %v396 = vld [vmem:[%s374 + $0x50] sm:$0xff]
            %397 = vst [vmem:[%s375 + $0x50] sm:$0xff] %v396
            %v398 = vld [vmem:[%s374 + $0x58] sm:$0xff]
            %399 = vst [vmem:[%s375 + $0x58] sm:$0xff] %v398
            %v400 = vld [vmem:[%s374 + $0x60] sm:$0xff]
            %401 = vst [vmem:[%s375 + $0x60] sm:$0xff] %v400
            %v402 = vld [vmem:[%s374 + $0x68] sm:$0xff]
            %403 = vst [vmem:[%s375 + $0x68] sm:$0xff] %v402
            %v404 = vld [vmem:[%s374 + $0x70] sm:$0xff]
            %405 = vst [vmem:[%s375 + $0x70] sm:$0xff] %v404
            %v406 = vld [vmem:[%s374 + $0x78] sm:$0xff]
            %407 = vst [vmem:[%s375 + $0x78] sm:$0xff] %v406
          $region63: #{reverse.0} parent=57 // loop_footer
            %s373 = sadd.s32 1, %s369
          $region64: #{reverse.0} parent=57 // loop_footer_branch
            %368 = sbr.rel target = $region60
          $region65: #{reverse.0} parent=57 // loop_exit
            _
        $region58: #{reverse.0} parent=42 // pred_fallthru
          _
        // Predicated region
        $region66: #{reverse.0} parent=42 // pred_check
          _
        $region67: #{reverse.0} parent=42 // pred_check_branch
          %409 = sbr.rel target = $region69
        $region68: #{reverse.0} parent=42 // pred_region
          _
        $region69: #{reverse.0} parent=42 // pred_fallthru
          _
      $region43: #{reverse.0} parent=38 // pred_fallthru
        _
      // Predicated region
      $region44: #{reverse.0} parent=38 // pred_check
        _
      $region45: #{reverse.0} parent=38 // pred_check_branch
        %323 = sbr.rel target = $region47
      $region46: #{reverse.0} parent=38 // pred_region
        %s325 = ssub.s32 256, 1
        loop: start=0, step=1, limit=1
        $region48: #{reverse.0} parent=46 // loop_pre_header
          _
        $region49: #{reverse.0} parent=46 // loop_header
          %s327 = sphi 0, %s331
          %p328 = scmp.ge.s32.totalorder %s327, 1
          %s332 = sphi [#allocation1], [#allocation1]
          %s333 = sphi %s1, %s1
        $region50: #{reverse.0} parent=46 // loop_header_branch
          %330 = sbr.rel (%p328) target = $region54
        $region51: #{reverse.0} parent=46 // loop_body
          %v334 = vld [vmem:[%s332] sm:%s325]
          %335 = vst [vmem:[%s333] sm:%s325] %v334
          %v336 = vld [vmem:[%s332 + $0x8] sm:%s325]
          %337 = vst [vmem:[%s333 + $0x8] sm:%s325] %v336
          %v338 = vld [vmem:[%s332 + $0x10] sm:%s325]
          %339 = vst [vmem:[%s333 + $0x10] sm:%s325] %v338
          %v340 = vld [vmem:[%s332 + $0x18] sm:%s325]
          %341 = vst [vmem:[%s333 + $0x18] sm:%s325] %v340
          %v342 = vld [vmem:[%s332 + $0x20] sm:%s325]
          %343 = vst [vmem:[%s333 + $0x20] sm:%s325] %v342
          %v344 = vld [vmem:[%s332 + $0x28] sm:%s325]
          %345 = vst [vmem:[%s333 + $0x28] sm:%s325] %v344
          %v346 = vld [vmem:[%s332 + $0x30] sm:%s325]
          %347 = vst [vmem:[%s333 + $0x30] sm:%s325] %v346
          %v348 = vld [vmem:[%s332 + $0x38] sm:%s325]
          %349 = vst [vmem:[%s333 + $0x38] sm:%s325] %v348
          %v350 = vld [vmem:[%s332 + $0x40] sm:%s325]
          %351 = vst [vmem:[%s333 + $0x40] sm:%s325] %v350
          %v352 = vld [vmem:[%s332 + $0x48] sm:%s325]
          %353 = vst [vmem:[%s333 + $0x48] sm:%s325] %v352
          %v354 = vld [vmem:[%s332 + $0x50] sm:%s325]
          %355 = vst [vmem:[%s333 + $0x50] sm:%s325] %v354
          %v356 = vld [vmem:[%s332 + $0x58] sm:%s325]
          %357 = vst [vmem:[%s333 + $0x58] sm:%s325] %v356
          %v358 = vld [vmem:[%s332 + $0x60] sm:%s325]
          %359 = vst [vmem:[%s333 + $0x60] sm:%s325] %v358
          %v360 = vld [vmem:[%s332 + $0x68] sm:%s325]
          %361 = vst [vmem:[%s333 + $0x68] sm:%s325] %v360
          %v362 = vld [vmem:[%s332 + $0x70] sm:%s325]
          %363 = vst [vmem:[%s333 + $0x70] sm:%s325] %v362
          %v364 = vld [vmem:[%s332 + $0x78] sm:%s325]
          %365 = vst [vmem:[%s333 + $0x78] sm:%s325] %v364
        $region52: #{reverse.0} parent=46 // loop_footer
          %s331 = sadd.s32 1, %s327
        $region53: #{reverse.0} parent=46 // loop_footer_branch
          %326 = sbr.rel target = $region49
        $region54: #{reverse.0} parent=46 // loop_exit
          _
      $region47: #{reverse.0} parent=38 // pred_fallthru
        _
    $region39: #{reverse.0} parent=1 // pred_fallthru
      _
    %410 = vnop

// kernel: fourier_conv_forward.4
$region0: #{fourier_conv_forward.4}
  #allocation0 [shape = 'u32[]', space=smem, size = 0x4, offset = 0x4, fixed_abs, tag = 'smem constant byte address 0x4 - core index']
  #allocation1 [shape = 'u32[72,128]{1,0:T(1,128)}', space=vmem, size = 0x9000, scoped, tag = 'internal scratch']
  %s0 = inlined_call_operand.vmem [shape: f32[2,4,512], index: 0, kind: input, shape index: {}]
  %s1 = inlined_call_operand.vmem [shape: f32[9,512], index: 1, kind: input, shape index: {}]
  %s2 = inlined_call_operand.vmem [shape: f32[9,4,4], index: 2, kind: input, shape index: {}]
  %s3 = inlined_call_operand.vmem [shape: f32[4,1], index: 3, kind: input, shape index: {}]
  %s4 = inlined_call_operand.vmem [shape: f32[2,4,512], index: 4, kind: output, shape index: {}]
  %s5 = sld [smem:[#allocation0]]
  $region49: #{fourier_conv_forward.4} parent=0
    _
  %s7 = ssub.s32 1, %s5
  %s8 = scalar_select 0, %s7, %s5
  loop: start=0, step=1, limit=4
  $region2: #{fourier_conv_forward.4} parent=0 // loop_pre_header
    _
  $region3: #{fourier_conv_forward.4} parent=0 // loop_header
    %s10 = sphi 0, %s14
    %p11 = scmp.ge.s32.totalorder %s10, 4
    %s20 = sphi 0, %s22
    %s23 = sphi 0, %s20
    %s24 = sphi 0, %s23
    %s40 = sphi 0, %s24
    %s44 = sphi 0, %s44
    %s46 = sphi 0, %s44
    %s47 = sphi 0, %s46
    %s61 = sphi 0, %s47
    %s65 = sphi 0, %s65
    %s67 = sphi 0, %s65
    %s68 = sphi 0, %s67
    %s82 = sphi 0, %s68
    %s86 = sphi 0, %s86
    %s88 = sphi 0, %s86
    %s89 = sphi 0, %s88
    %s103 = sphi 0, %s89
    %s109 = sphi 0, %s111
    %s112 = sphi 0, %s109
    %s113 = sphi 0, %s112
    %s129 = sphi 0, %s113
  $region4: #{fourier_conv_forward.4} parent=0 // loop_header_branch
    %13 = sbr.rel (%p11) target = $region8
  $region5: #{fourier_conv_forward.4} parent=0 // loop_body
    %s15 = ssub.s32 %s10, 1
    %s16 = ssub.s32 %s10, 2
    %s17 = sadd.s32 %s10, 1
    %s18 = ssub.s32 %s10, %s17
    %p19 = scmp.eq.s32.totalorder %s18, 0
    %s21 = sadd.s32 %s20, 1
    %s22 = scalar_select %p19, %s20, %s21
    %p25 = pneg %p19
    %p26 = scmp.eq.s32.totalorder %s10, 1
    %p27 = por %p25, %p26
    %p28 = scmp.ne.s32.totalorder %s20, %s23
    %p29 = scmp.eq.s32.totalorder %s10, 0
    %p30 = por %p28, %p29
    %p31 = scmp.ne.s32.totalorder %s20, %s23
    %p32 = scmp.eq.s32.totalorder %s15, 1
    %p33 = por %p31, %p32
    %p34 = scmp.ne.s32.totalorder %s23, %s24
    %p35 = scmp.eq.s32.totalorder %s15, 0
    %p36 = por %p34, %p35
    %p37 = scmp.ne.s32.totalorder %s23, %s24
    %p38 = scmp.eq.s32.totalorder %s16, 1
    %p39 = por %p37, %p38
    %p41 = scmp.ne.s32.totalorder %s24, %s40
    %p42 = scmp.eq.s32.totalorder %s16, 0
    %p43 = por %p41, %p42
    %s45 = sadd.s32 %s44, 1
    %p48 = scmp.eq.s32.totalorder %s10, 1
    %p49 = scmp.ne.s32.totalorder %s44, %s46
    %p50 = scmp.eq.s32.totalorder %s10, 0
    %p51 = por %p49, %p50
    %p52 = scmp.ne.s32.totalorder %s44, %s46
    %p53 = scmp.eq.s32.totalorder %s15, 1
    %p54 = por %p52, %p53
    %p55 = scmp.ne.s32.totalorder %s46, %s47
    %p56 = scmp.eq.s32.totalorder %s15, 0
    %p57 = por %p55, %p56
    %p58 = scmp.ne.s32.totalorder %s46, %s47
    %p59 = scmp.eq.s32.totalorder %s16, 1
    %p60 = por %p58, %p59
    %p62 = scmp.ne.s32.totalorder %s47, %s61
    %p63 = scmp.eq.s32.totalorder %s16, 0
    %p64 = por %p62, %p63
    %s66 = sadd.s32 %s65, 1
    %p69 = scmp.eq.s32.totalorder %s10, 1
    %p70 = scmp.ne.s32.totalorder %s65, %s67
    %p71 = scmp.eq.s32.totalorder %s10, 0
    %p72 = por %p70, %p71
    %p73 = scmp.ne.s32.totalorder %s65, %s67
    %p74 = scmp.eq.s32.totalorder %s15, 1
    %p75 = por %p73, %p74
    %p76 = scmp.ne.s32.totalorder %s67, %s68
    %p77 = scmp.eq.s32.totalorder %s15, 0
    %p78 = por %p76, %p77
    %p79 = scmp.ne.s32.totalorder %s67, %s68
    %p80 = scmp.eq.s32.totalorder %s16, 1
    %p81 = por %p79, %p80
    %p83 = scmp.ne.s32.totalorder %s68, %s82
    %p84 = scmp.eq.s32.totalorder %s16, 0
    %p85 = por %p83, %p84
    %s87 = sadd.s32 %s86, 1
    %p90 = scmp.eq.s32.totalorder %s10, 1
    %p91 = scmp.ne.s32.totalorder %s86, %s88
    %p92 = scmp.eq.s32.totalorder %s10, 0
    %p93 = por %p91, %p92
    %p94 = scmp.ne.s32.totalorder %s86, %s88
    %p95 = scmp.eq.s32.totalorder %s15, 1
    %p96 = por %p94, %p95
    %p97 = scmp.ne.s32.totalorder %s88, %s89
    %p98 = scmp.eq.s32.totalorder %s15, 0
    %p99 = por %p97, %p98
    %p100 = scmp.ne.s32.totalorder %s88, %s89
    %p101 = scmp.eq.s32.totalorder %s16, 1
    %p102 = por %p100, %p101
    %p104 = scmp.ne.s32.totalorder %s89, %s103
    %p105 = scmp.eq.s32.totalorder %s16, 0
    %p106 = por %p104, %p105
    %s107 = ssub.s32 %s10, %s17
    %p108 = scmp.eq.s32.totalorder %s107, 0
    %s110 = sadd.s32 %s109, 1
    %s111 = scalar_select %p108, %s109, %s110
    %p114 = pneg %p108
    %p115 = scmp.eq.s32.totalorder %s10, 1
    %p116 = por %p114, %p115
    %p117 = scmp.ne.s32.totalorder %s109, %s112
    %p118 = scmp.eq.s32.totalorder %s10, 0
    %p119 = por %p117, %p118
    %p120 = scmp.ne.s32.totalorder %s109, %s112
    %p121 = scmp.eq.s32.totalorder %s15, 1
    %p122 = por %p120, %p121
    %p123 = scmp.ne.s32.totalorder %s112, %s113
    %p124 = scmp.eq.s32.totalorder %s15, 0
    %p125 = por %p123, %p124
    %p126 = scmp.ne.s32.totalorder %s112, %s113
    %p127 = scmp.eq.s32.totalorder %s16, 1
    %p128 = por %p126, %p127
    %p130 = scmp.ne.s32.totalorder %s113, %s129
    %p131 = scmp.eq.s32.totalorder %s16, 0
    %p132 = por %p130, %p131
    %p133 = scmp.le.s32.totalorder 1, %s10
    %p134 = scmp.lt.s32.totalorder %s10, 3
    %p135 = pnand %p133, %p134
    %p136 = pneg %p135
    // Predicated region
    $region9: #{fourier_conv_forward.4} parent=5 // pred_check
      _
    $region10: #{fourier_conv_forward.4} parent=5 // pred_check_branch
      %138 = sbr.rel (%p135) target = $region12
    $region11: #{fourier_conv_forward.4} parent=5 // pred_region
      %s139 = ssub.s32 %s10, 1
      // Predicated region
      $region13: #{fourier_conv_forward.4} parent=11 // pred_check
        %p140 = pneg %p57
      $region14: #{fourier_conv_forward.4} parent=11 // pred_check_branch
        %142 = sbr.rel (%p140) target = $region16
      $region15: #{fourier_conv_forward.4} parent=11 // pred_region
        _
      $region16: #{fourier_conv_forward.4} parent=11 // pred_fallthru
        _
      // Predicated region
      $region17: #{fourier_conv_forward.4} parent=11 // pred_check
        %p143 = pneg %p78
      $region18: #{fourier_conv_forward.4} parent=11 // pred_check_branch
        %145 = sbr.rel (%p143) target = $region20
      $region19: #{fourier_conv_forward.4} parent=11 // pred_region
        _
      $region20: #{fourier_conv_forward.4} parent=11 // pred_fallthru
        _
      // Predicated region
      $region21: #{fourier_conv_forward.4} parent=11 // pred_check
        %p146 = pneg %p99
      $region22: #{fourier_conv_forward.4} parent=11 // pred_check_branch
        %148 = sbr.rel (%p146) target = $region24
      $region23: #{fourier_conv_forward.4} parent=11 // pred_region
        _
      $region24: #{fourier_conv_forward.4} parent=11 // pred_fallthru
        _
    $region12: #{fourier_conv_forward.4} parent=5 // pred_fallthru
      _
    %p149 = scmp.lt.s32.totalorder %s10, 2
    // Predicated region
    $region25: #{fourier_conv_forward.4} parent=5 // pred_check
      %p150 = pneg %p149
    $region26: #{fourier_conv_forward.4} parent=5 // pred_check_branch
      %152 = sbr.rel (%p150) target = $region28
    $region27: #{fourier_conv_forward.4} parent=5 // pred_region
      // Predicated region
      $region29: #{fourier_conv_forward.4} parent=27 // pred_check
        %p153 = pneg %p30
      $region30: #{fourier_conv_forward.4} parent=27 // pred_check_branch
        %155 = sbr.rel (%p153) target = $region32
      $region31: #{fourier_conv_forward.4} parent=27 // pred_region
        %p156 = scmp.lt.s32.totalorder %s10, 1
        %s157 = scalar_select %p156, %s10, 1
        %s158 = smul.addr %s157, 4
        %s159 = smul.addr %s158, 4
        %s160 = scalar_lea.vmem %s0, %s159
      $region32: #{fourier_conv_forward.4} parent=27 // pred_fallthru
        _
    $region28: #{fourier_conv_forward.4} parent=5 // pred_fallthru
      _
    %p161 = scmp.le.s32.totalorder 1, %s10
    %p162 = scmp.lt.s32.totalorder %s10, 3
    %p163 = pnand %p161, %p162
    %p164 = pneg %p163
    // Predicated region
    $region33: #{fourier_conv_forward.4} parent=5 // pred_check
      _
    $region34: #{fourier_conv_forward.4} parent=5 // pred_check_branch
      %166 = sbr.rel (%p163) target = $region36
    $region35: #{fourier_conv_forward.4} parent=5 // pred_region
      %s167 = ssub.s32 %s10, 1
      %p168 = scmp.lt.s32.totalorder %s15, 1
      %s169 = scalar_select %p168, %s15, 1
      %s170 = smul.addr %s169, 4
      %s171 = smul.addr %s170, 4
      %s172 = scalar_lea.vmem %s0, %s171
      %p173 = pneg %p36
      %p174 = pneg %p33
      %p175 = pneg %p57
      %p176 = pneg %p54
      %p177 = pneg %p78
      %p178 = pneg %p75
      %p179 = pneg %p99
      %p180 = pneg %p96
      %p181 = pneg %p125
      %p182 = pneg %p122
      %p183 = scmp.lt.s32.totalorder %s15, 1
      %s184 = scalar_select %p183, %s15, 1
      %s185 = smul.addr %s184, 4
      %s186 = smul.addr %s185, 4
      %s187 = scalar_lea.vmem %s4, %s186
      %p188 = scmp.lt.s32.totalorder %s15, 1
      %s189 = scalar_select %p188, %s15, 1
      %s190 = smul.addr %s189, 4
      %s191 = smul.addr %s190, 4
      %s192 = scalar_lea.vmem %s0, %s191
      %p193 = scmp.lt.s32.totalorder %s15, 1
      %s194 = scalar_select %p193, %s15, 1
      %s195 = smul.addr %s194, 4
      %s196 = smul.addr %s195, 4
      %s197 = scalar_lea.vmem %s4, %s196
      %v198 = vld [vmem:[%s192] sm:$0xff]
      %v199 = vld [vmem:[%s192 + $0x8] sm:$0xff]
      %202 = vst [vmem:[#allocation1] ss:$2 sm:$0xff] %v198
      %s203 = scalar_lea.vmem [#allocation1], 16
      %204 = vst [vmem:[%s203] ss:$2 sm:$0xff] %v199
      %v205 = vld.sshfl [vmem:[#allocation1] sm:$0xff pattern:$0x75316420]
      %v206 = vld.sshfl [vmem:[#allocation1 + $0x8] sm:$0xff pattern:$0x75316420]
      %v207 = vld.sshfl [vmem:[#allocation1 + $0x10] sm:$0xff pattern:$0x75316420]
      %v208 = vld.sshfl [vmem:[#allocation1 + $0x18] sm:$0xff pattern:$0x75316420]
      %209 = vrot.lane.b32.xlu0 %v205, 17
      %v210 = vpop.permute.xlu0 %209
      %211 = vrot.lane.b32.xlu0 %v206, 17
      %v212 = vpop.permute.xlu0 %211
      %213 = vrot.lane.b32.xlu0 %v207, 17
      %v214 = vpop.permute.xlu0 %213
      %215 = vrot.lane.b32.xlu0 %v208, 17
      %v216 = vpop.permute.xlu0 %215
      %vm217 = vcmask 138240
      %v218 = vsel %vm217, %v210, %v212
      %v219 = vsel %vm217, %v212, %v214
      %v220 = vsel %vm217, %v214, %v216
      %v226 = vsel %vm217, 0.0, %v210
      %v227 = vsel %vm217, %v216, 0.0
      %v228 = vld [vmem:[%s1] ss:$8 sm:$0xf]
      %v230 = vperm.slane %v228, 0
      %v231 = vperm.slane %v228, 1
      %v232 = vperm.slane %v228, 2
      %v233 = vperm.slane %v228, 3
      %v238 = vmul.f32 %v226, %v230
      %v239 = vmul.f32 %v218, %v231
      %v240 = vmul.f32 %v219, %v232
      %v241 = vmul.f32 %v220, %v233
      %v242 = vld [vmem:[%s2] sm:$0xf]
      %s243 = scalar_lea.vmem %s1, 1
      %v244 = vld [vmem:[%s243] ss:$8 sm:$0xf]
      %v246 = vperm.slane %v244, 0
      %v247 = vperm.slane %v244, 1
      %v248 = vperm.slane %v244, 2
      %v249 = vperm.slane %v244, 3
      %250 = vrot.lane.b32.xlu0 %v246, 1
      %v251 = vpop.permute.xlu0 %250
      %252 = vrot.lane.b32.xlu0 %v247, 1
      %v253 = vpop.permute.xlu0 %252
      %254 = vrot.lane.b32.xlu0 %v248, 1
      %v255 = vpop.permute.xlu0 %254
      %256 = vrot.lane.b32.xlu0 %v249, 1
      %v257 = vpop.permute.xlu0 %256
      %vm258 = vcmask 7168
      %v259 = vsel %vm258, %v251, %v253
      %v260 = vsel %vm258, %v253, %v255
      %v261 = vsel %vm258, %v255, %v257
      %v267 = vmul.f32 %v226, %v251
      %v268 = vmul.f32 %v218, %v259
      %v269 = vmul.f32 %v219, %v260
      %v270 = vmul.f32 %v220, %v261
      %v271 = vmul.f32 %v227, %v257
      %s272 = scalar_lea.vmem %s2, 4
      %v273 = vld [vmem:[%s272] sm:$0xf]
      %279 = vrot.lane.b32.xlu0 %v267, 127
      %v280 = vpop.permute.xlu0 %279
      %281 = vrot.lane.b32.xlu0 %v268, 127
      %v282 = vpop.permute.xlu0 %281
      %283 = vrot.lane.b32.xlu0 %v269, 127
      %v284 = vpop.permute.xlu0 %283
      %285 = vrot.lane.b32.xlu0 %v270, 127
      %v286 = vpop.permute.xlu0 %285
      %287 = vrot.lane.b32.xlu0 %v271, 127
      %v288 = vpop.permute.xlu0 %287
      %vm289 = vcmask 1039360
      %v290 = vsel %vm289, %v280, %v282
      %v291 = vsel %vm289, %v282, %v284
      %v292 = vsel %vm289, %v284, %v286
      %v293 = vsel %vm289, %v286, %v288
      %vm294 = vcmask 31744
      %v296 = vsel %vm294, %v273, 0
      %vm298 = vcmask 1043456
      %v299 = vsel %vm298, %v290, 0
      %v301 = vsel %vm298, %v291, 0
      %v303 = vsel %vm298, %v292, 0
      %v305 = vsel %vm298, %v293, 0
      %307 = vmatpush.msra.mxu0 0.0
      %308 = vmatpush.msra.mxu0 0.0
      %309 = vmatpush.msra.mxu0 0.0
      %310 = vmatpush.msra.mxu0 0.0
      %311 = vmatpush.msra.mxu0 0.0
      %312 = vmatpush.msra.mxu0 0.0
      %313 = vmatpush.msra.mxu0 0.0
      %314 = vmatpush.msra.mxu0 0.0
      %315 = vmatpush.msra.mxu0 0.0
      %316 = vmatpush.msra.mxu0 0.0
      %317 = vmatpush.msra.mxu0 0.0
      %318 = vmatpush.msra.mxu0 0.0
      %319 = vmatpush.msra.mxu0 0.0
      %320 = vmatpush.msra.mxu0 0.0
      %321 = vmatpush.msra.mxu0 0.0
      %322 = vmatpush.msra.mxu0 %v299
      %323 = vmatmul.f32.gmra.mxu0 %v296
      %v324 = vpop.f32.mrf.mxu0
      %v325 = vadd.f32 0.0, %v324
      %326 = vdwg.mxu0
      %327 = vmatpush.msra.mxu0 0.0
      %328 = vmatpush.msra.mxu0 0.0
      %329 = vmatpush.msra.mxu0 0.0
      %330 = vmatpush.msra.mxu0 0.0
      %331 = vmatpush.msra.mxu0 0.0
      %332 = vmatpush.msra.mxu0 0.0
      %333 = vmatpush.msra.mxu0 0.0
      %334 = vmatpush.msra.mxu0 0.0
      %335 = vmatpush.msra.mxu0 0.0
      %336 = vmatpush.msra.mxu0 0.0
      %337 = vmatpush.msra.mxu0 0.0
      %338 = vmatpush.msra.mxu0 0.0
      %339 = vmatpush.msra.mxu0 0.0
      %340 = vmatpush.msra.mxu0 0.0
      %341 = vmatpush.msra.mxu0 0.0
      %342 = vmatpush.msra.mxu0 %v301
      %343 = vmatmul.f32.gmra.mxu0 %v296
      %v344 = vpop.f32.mrf.mxu0
      %v345 = vadd.f32 0.0, %v344
      %346 = vdwg.mxu0
      %347 = vmatpush.msra.mxu0 0.0
      %348 = vmatpush.msra.mxu0 0.0
      %349 = vmatpush.msra.mxu0 0.0
      %350 = vmatpush.msra.mxu0 0.0
      %351 = vmatpush.msra.mxu0 0.0
      %352 = vmatpush.msra.mxu0 0.0
      %353 = vmatpush.msra.mxu0 0.0
      %354 = vmatpush.msra.mxu0 0.0
      %355 = vmatpush.msra.mxu0 0.0
      %356 = vmatpush.msra.mxu0 0.0
      %357 = vmatpush.msra.mxu0 0.0
      %358 = vmatpush.msra.mxu0 0.0
      %359 = vmatpush.msra.mxu0 0.0
      %360 = vmatpush.msra.mxu0 0.0
      %361 = vmatpush.msra.mxu0 0.0
      %362 = vmatpush.msra.mxu0 %v303
      %363 = vmatmul.f32.gmra.mxu0 %v296
      %v364 = vpop.f32.mrf.mxu0
      %v365 = vadd.f32 0.0, %v364
      %366 = vdwg.mxu0
      %367 = vmatpush.msra.mxu0 0.0
      %368 = vmatpush.msra.mxu0 0.0
      %369 = vmatpush.msra.mxu0 0.0
      %370 = vmatpush.msra.mxu0 0.0
      %371 = vmatpush.msra.mxu0 0.0
      %372 = vmatpush.msra.mxu0 0.0
      %373 = vmatpush.msra.mxu0 0.0
      %374 = vmatpush.msra.mxu0 0.0
      %375 = vmatpush.msra.mxu0 0.0
      %376 = vmatpush.msra.mxu0 0.0
      %377 = vmatpush.msra.mxu0 0.0
      %378 = vmatpush.msra.mxu0 0.0
      %379 = vmatpush.msra.mxu0 0.0
      %380 = vmatpush.msra.mxu0 0.0
      %381 = vmatpush.msra.mxu0 0.0
      %382 = vmatpush.msra.mxu0 %v305
      %383 = vmatmul.f32.gmra.mxu0 %v296
      %v384 = vpop.f32.mrf.mxu0
      %v385 = vadd.f32 0.0, %v384
      %386 = vdwg.mxu0
      %v388 = vsel %vm294, %v242, 0
      %v391 = vsel %vm298, %v238, 0
      %v394 = vsel %vm298, %v239, 0
      %v397 = vsel %vm298, %v240, 0
      %v400 = vsel %vm298, %v241, 0
      %402 = vmatpush.msra.mxu0 0.0
      %403 = vmatpush.msra.mxu0 0.0
      %404 = vmatpush.msra.mxu0 0.0
      %405 = vmatpush.msra.mxu0 0.0
      %406 = vmatpush.msra.mxu0 0.0
      %407 = vmatpush.msra.mxu0 0.0
      %408 = vmatpush.msra.mxu0 0.0
      %409 = vmatpush.msra.mxu0 0.0
      %410 = vmatpush.msra.mxu0 0.0
      %411 = vmatpush.msra.mxu0 0.0
      %412 = vmatpush.msra.mxu0 0.0
      %413 = vmatpush.msra.mxu0 0.0
      %414 = vmatpush.msra.mxu0 0.0
      %415 = vmatpush.msra.mxu0 0.0
      %416 = vmatpush.msra.mxu0 0.0
      %417 = vmatpush.msra.mxu0 %v391
      %418 = vmatmul.f32.gmra.mxu0 %v388
      %v419 = vpop.f32.mrf.mxu0
      %v420 = vadd.f32 %v325, %v419
      %421 = vdwg.mxu0
      %422 = vmatpush.msra.mxu0 0.0
      %423 = vmatpush.msra.mxu0 0.0
      %424 = vmatpush.msra.mxu0 0.0
      %425 = vmatpush.msra.mxu0 0.0
      %426 = vmatpush.msra.mxu0 0.0
      %427 = vmatpush.msra.mxu0 0.0
      %428 = vmatpush.msra.mxu0 0.0
      %429 = vmatpush.msra.mxu0 0.0
      %430 = vmatpush.msra.mxu0 0.0
      %431 = vmatpush.msra.mxu0 0.0
      %432 = vmatpush.msra.mxu0 0.0
      %433 = vmatpush.msra.mxu0 0.0
      %434 = vmatpush.msra.mxu0 0.0
      %435 = vmatpush.msra.mxu0 0.0
      %436 = vmatpush.msra.mxu0 0.0
      %437 = vmatpush.msra.mxu0 %v394
      %438 = vmatmul.f32.gmra.mxu0 %v388
      %v439 = vpop.f32.mrf.mxu0
      %v440 = vadd.f32 %v345, %v439
      %441 = vdwg.mxu0
      %442 = vmatpush.msra.mxu0 0.0
      %443 = vmatpush.msra.mxu0 0.0
      %444 = vmatpush.msra.mxu0 0.0
      %445 = vmatpush.msra.mxu0 0.0
      %446 = vmatpush.msra.mxu0 0.0
      %447 = vmatpush.msra.mxu0 0.0
      %448 = vmatpush.msra.mxu0 0.0
      %449 = vmatpush.msra.mxu0 0.0
      %450 = vmatpush.msra.mxu0 0.0
      %451 = vmatpush.msra.mxu0 0.0
      %452 = vmatpush.msra.mxu0 0.0
      %453 = vmatpush.msra.mxu0 0.0
      %454 = vmatpush.msra.mxu0 0.0
      %455 = vmatpush.msra.mxu0 0.0
      %456 = vmatpush.msra.mxu0 0.0
      %457 = vmatpush.msra.mxu0 %v397
      %458 = vmatmul.f32.gmra.mxu0 %v388
      %v459 = vpop.f32.mrf.mxu0
      %v460 = vadd.f32 %v365, %v459
      %461 = vdwg.mxu0
      %462 = vmatpush.msra.mxu0 0.0
      %463 = vmatpush.msra.mxu0 0.0
      %464 = vmatpush.msra.mxu0 0.0
      %465 = vmatpush.msra.mxu0 0.0
      %466 = vmatpush.msra.mxu0 0.0
      %467 = vmatpush.msra.mxu0 0.0
      %468 = vmatpush.msra.mxu0 0.0
      %469 = vmatpush.msra.mxu0 0.0
      %470 = vmatpush.msra.mxu0 0.0
      %471 = vmatpush.msra.mxu0 0.0
      %472 = vmatpush.msra.mxu0 0.0
      %473 = vmatpush.msra.mxu0 0.0
      %474 = vmatpush.msra.mxu0 0.0
      %475 = vmatpush.msra.mxu0 0.0
      %476 = vmatpush.msra.mxu0 0.0
      %477 = vmatpush.msra.mxu0 %v400
      %478 = vmatmul.f32.gmra.mxu0 %v388
      %v479 = vpop.f32.mrf.mxu0
      %v480 = vadd.f32 %v385, %v479
      %481 = vdwg.mxu0
      %s482 = scalar_lea.vmem %s1, 2
      %v483 = vld [vmem:[%s482] ss:$8 sm:$0xf]
      %v485 = vperm.slane %v483, 0
      %v486 = vperm.slane %v483, 1
      %v487 = vperm.slane %v483, 2
      %v488 = vperm.slane %v483, 3
      %489 = vrot.lane.b32.xlu0 %v485, 2
      %v490 = vpop.permute.xlu0 %489
      %491 = vrot.lane.b32.xlu0 %v486, 2
      %v492 = vpop.permute.xlu0 %491
      %493 = vrot.lane.b32.xlu0 %v487, 2
      %v494 = vpop.permute.xlu0 %493
      %495 = vrot.lane.b32.xlu0 %v488, 2
      %v496 = vpop.permute.xlu0 %495
      %vm497 = vcmask 15360
      %v498 = vsel %vm497, %v490, %v492
      %v499 = vsel %vm497, %v492, %v494
      %v500 = vsel %vm497, %v494, %v496
      %v506 = vmul.f32 %v226, %v490
      %v507 = vmul.f32 %v218, %v498
      %v508 = vmul.f32 %v219, %v499
      %v509 = vmul.f32 %v220, %v500
      %v510 = vmul.f32 %v227, %v496
      %s511 = scalar_lea.vmem %s2, 8
      %v512 = vld [vmem:[%s511] sm:$0xf]
      %518 = vrot.lane.b32.xlu0 %v506, 126
      %v519 = vpop.permute.xlu0 %518
      %520 = vrot.lane.b32.xlu0 %v507, 126
      %v521 = vpop.permute.xlu0 %520
      %522 = vrot.lane.b32.xlu0 %v508, 126
      %v523 = vpop.permute.xlu0 %522
      %524 = vrot.lane.b32.xlu0 %v509, 126
      %v525 = vpop.permute.xlu0 %524
      %526 = vrot.lane.b32.xlu0 %v510, 126
      %v527 = vpop.permute.xlu0 %526
      %vm528 = vcmask 1031168
      %v529 = vsel %vm528, %v519, %v521
      %v530 = vsel %vm528, %v521, %v523
      %v531 = vsel %vm528, %v523, %v525
      %v532 = vsel %vm528, %v525, %v527
      %v534 = vsel %vm294, %v512, 0
      %v536 = vsel %vm298, %v529, 0
      %v538 = vsel %vm298, %v530, 0
      %v540 = vsel %vm298, %v531, 0
      %v542 = vsel %vm298, %v532, 0
      %544 = vmatpush.msra.mxu0 0.0
      %545 = vmatpush.msra.mxu0 0.0
      %546 = vmatpush.msra.mxu0 0.0
      %547 = vmatpush.msra.mxu0 0.0
      %548 = vmatpush.msra.mxu0 0.0
      %549 = vmatpush.msra.mxu0 0.0
      %550 = vmatpush.msra.mxu0 0.0
      %551 = vmatpush.msra.mxu0 0.0
      %552 = vmatpush.msra.mxu0 0.0
      %553 = vmatpush.msra.mxu0 0.0
      %554 = vmatpush.msra.mxu0 0.0
      %555 = vmatpush.msra.mxu0 0.0
      %556 = vmatpush.msra.mxu0 0.0
      %557 = vmatpush.msra.mxu0 0.0
      %558 = vmatpush.msra.mxu0 0.0
      %559 = vmatpush.msra.mxu0 %v536
      %560 = vmatmul.f32.gmra.mxu0 %v534
      %v561 = vpop.f32.mrf.mxu0
      %v562 = vadd.f32 0.0, %v561
      %563 = vdwg.mxu0
      %564 = vmatpush.msra.mxu0 0.0
      %565 = vmatpush.msra.mxu0 0.0
      %566 = vmatpush.msra.mxu0 0.0
      %567 = vmatpush.msra.mxu0 0.0
      %568 = vmatpush.msra.mxu0 0.0
      %569 = vmatpush.msra.mxu0 0.0
      %570 = vmatpush.msra.mxu0 0.0
      %571 = vmatpush.msra.mxu0 0.0
      %572 = vmatpush.msra.mxu0 0.0
      %573 = vmatpush.msra.mxu0 0.0
      %574 = vmatpush.msra.mxu0 0.0
      %575 = vmatpush.msra.mxu0 0.0
      %576 = vmatpush.msra.mxu0 0.0
      %577 = vmatpush.msra.mxu0 0.0
      %578 = vmatpush.msra.mxu0 0.0
      %579 = vmatpush.msra.mxu0 %v538
      %580 = vmatmul.f32.gmra.mxu0 %v534
      %v581 = vpop.f32.mrf.mxu0
      %v582 = vadd.f32 0.0, %v581
      %583 = vdwg.mxu0
      %584 = vmatpush.msra.mxu0 0.0
      %585 = vmatpush.msra.mxu0 0.0
      %586 = vmatpush.msra.mxu0 0.0
      %587 = vmatpush.msra.mxu0 0.0
      %588 = vmatpush.msra.mxu0 0.0
      %589 = vmatpush.msra.mxu0 0.0
      %590 = vmatpush.msra.mxu0 0.0
      %591 = vmatpush.msra.mxu0 0.0
      %592 = vmatpush.msra.mxu0 0.0
      %593 = vmatpush.msra.mxu0 0.0
      %594 = vmatpush.msra.mxu0 0.0
      %595 = vmatpush.msra.mxu0 0.0
      %596 = vmatpush.msra.mxu0 0.0
      %597 = vmatpush.msra.mxu0 0.0
      %598 = vmatpush.msra.mxu0 0.0
      %599 = vmatpush.msra.mxu0 %v540
      %600 = vmatmul.f32.gmra.mxu0 %v534
      %v601 = vpop.f32.mrf.mxu0
      %v602 = vadd.f32 0.0, %v601
      %603 = vdwg.mxu0
      %604 = vmatpush.msra.mxu0 0.0
      %605 = vmatpush.msra.mxu0 0.0
      %606 = vmatpush.msra.mxu0 0.0
      %607 = vmatpush.msra.mxu0 0.0
      %608 = vmatpush.msra.mxu0 0.0
      %609 = vmatpush.msra.mxu0 0.0
      %610 = vmatpush.msra.mxu0 0.0
      %611 = vmatpush.msra.mxu0 0.0
      %612 = vmatpush.msra.mxu0 0.0
      %613 = vmatpush.msra.mxu0 0.0
      %614 = vmatpush.msra.mxu0 0.0
      %615 = vmatpush.msra.mxu0 0.0
      %616 = vmatpush.msra.mxu0 0.0
      %617 = vmatpush.msra.mxu0 0.0
      %618 = vmatpush.msra.mxu0 0.0
      %619 = vmatpush.msra.mxu0 %v542
      %620 = vmatmul.f32.gmra.mxu0 %v534
      %v621 = vpop.f32.mrf.mxu0
      %v622 = vadd.f32 0.0, %v621
      %623 = vdwg.mxu0
      %v624 = vadd.f32 %v420, %v562
      %v625 = vadd.f32 %v440, %v582
      %v626 = vadd.f32 %v460, %v602
      %v627 = vadd.f32 %v480, %v622
      %s628 = scalar_lea.vmem %s1, 3
      %v629 = vld [vmem:[%s628] ss:$8 sm:$0xf]
      %v631 = vperm.slane %v629, 0
      %v632 = vperm.slane %v629, 1
      %v633 = vperm.slane %v629, 2
      %v634 = vperm.slane %v629, 3
      %635 = vrot.lane.b32.xlu0 %v631, 16
      %v636 = vpop.permute.xlu0 %635
      %637 = vrot.lane.b32.xlu0 %v632, 16
      %v638 = vpop.permute.xlu0 %637
      %639 = vrot.lane.b32.xlu0 %v633, 16
      %v640 = vpop.permute.xlu0 %639
      %641 = vrot.lane.b32.xlu0 %v634, 16
      %v642 = vpop.permute.xlu0 %641
      %vm643 = vcmask 130048
      %v644 = vsel %vm643, %v636, %v638
      %v645 = vsel %vm643, %v638, %v640
      %v646 = vsel %vm643, %v640, %v642
      %v652 = vmul.f32 %v226, %v636
      %v653 = vmul.f32 %v218, %v644
      %v654 = vmul.f32 %v219, %v645
      %v655 = vmul.f32 %v220, %v646
      %v656 = vmul.f32 %v227, %v642
      %s657 = scalar_lea.vmem %s2, 12
      %v658 = vld [vmem:[%s657] sm:$0xf]
      %664 = vrot.lane.b32.xlu0 %v652, 112
      %v665 = vpop.permute.xlu0 %664
      %666 = vrot.lane.b32.xlu0 %v653, 112
      %v667 = vpop.permute.xlu0 %666
      %668 = vrot.lane.b32.xlu0 %v654, 112
      %v669 = vpop.permute.xlu0 %668
      %670 = vrot.lane.b32.xlu0 %v655, 112
      %v671 = vpop.permute.xlu0 %670
      %672 = vrot.lane.b32.xlu0 %v656, 112
      %v673 = vpop.permute.xlu0 %672
      %vm674 = vcmask 916480
      %v675 = vsel %vm674, %v665, %v667
      %v676 = vsel %vm674, %v667, %v669
      %v677 = vsel %vm674, %v669, %v671
      %v678 = vsel %vm674, %v671, %v673
      %v680 = vsel %vm294, %v658, 0
      %v682 = vsel %vm298, %v675, 0
      %v684 = vsel %vm298, %v676, 0
      %v686 = vsel %vm298, %v677, 0
      %v688 = vsel %vm298, %v678, 0
      %690 = vmatpush.msra.mxu0 0.0
      %691 = vmatpush.msra.mxu0 0.0
      %692 = vmatpush.msra.mxu0 0.0
      %693 = vmatpush.msra.mxu0 0.0
      %694 = vmatpush.msra.mxu0 0.0
      %695 = vmatpush.msra.mxu0 0.0
      %696 = vmatpush.msra.mxu0 0.0
      %697 = vmatpush.msra.mxu0 0.0
      %698 = vmatpush.msra.mxu0 0.0
      %699 = vmatpush.msra.mxu0 0.0
      %700 = vmatpush.msra.mxu0 0.0
      %701 = vmatpush.msra.mxu0 0.0
      %702 = vmatpush.msra.mxu0 0.0
      %703 = vmatpush.msra.mxu0 0.0
      %704 = vmatpush.msra.mxu0 0.0
      %705 = vmatpush.msra.mxu0 %v682
      %706 = vmatmul.f32.gmra.mxu0 %v680
      %v707 = vpop.f32.mrf.mxu0
      %v708 = vadd.f32 0.0, %v707
      %709 = vdwg.mxu0
      %710 = vmatpush.msra.mxu0 0.0
      %711 = vmatpush.msra.mxu0 0.0
      %712 = vmatpush.msra.mxu0 0.0
      %713 = vmatpush.msra.mxu0 0.0
      %714 = vmatpush.msra.mxu0 0.0
      %715 = vmatpush.msra.mxu0 0.0
      %716 = vmatpush.msra.mxu0 0.0
      %717 = vmatpush.msra.mxu0 0.0
      %718 = vmatpush.msra.mxu0 0.0
      %719 = vmatpush.msra.mxu0 0.0
      %720 = vmatpush.msra.mxu0 0.0
      %721 = vmatpush.msra.mxu0 0.0
      %722 = vmatpush.msra.mxu0 0.0
      %723 = vmatpush.msra.mxu0 0.0
      %724 = vmatpush.msra.mxu0 0.0
      %725 = vmatpush.msra.mxu0 %v684
      %726 = vmatmul.f32.gmra.mxu0 %v680
      %v727 = vpop.f32.mrf.mxu0
      %v728 = vadd.f32 0.0, %v727
      %729 = vdwg.mxu0
      %730 = vmatpush.msra.mxu0 0.0
      %731 = vmatpush.msra.mxu0 0.0
      %732 = vmatpush.msra.mxu0 0.0
      %733 = vmatpush.msra.mxu0 0.0
      %734 = vmatpush.msra.mxu0 0.0
      %735 = vmatpush.msra.mxu0 0.0
      %736 = vmatpush.msra.mxu0 0.0
      %737 = vmatpush.msra.mxu0 0.0
      %738 = vmatpush.msra.mxu0 0.0
      %739 = vmatpush.msra.mxu0 0.0
      %740 = vmatpush.msra.mxu0 0.0
      %741 = vmatpush.msra.mxu0 0.0
      %742 = vmatpush.msra.mxu0 0.0
      %743 = vmatpush.msra.mxu0 0.0
      %744 = vmatpush.msra.mxu0 0.0
      %745 = vmatpush.msra.mxu0 %v686
      %746 = vmatmul.f32.gmra.mxu0 %v680
      %v747 = vpop.f32.mrf.mxu0
      %v748 = vadd.f32 0.0, %v747
      %749 = vdwg.mxu0
      %750 = vmatpush.msra.mxu0 0.0
      %751 = vmatpush.msra.mxu0 0.0
      %752 = vmatpush.msra.mxu0 0.0
      %753 = vmatpush.msra.mxu0 0.0
      %754 = vmatpush.msra.mxu0 0.0
      %755 = vmatpush.msra.mxu0 0.0
      %756 = vmatpush.msra.mxu0 0.0
      %757 = vmatpush.msra.mxu0 0.0
      %758 = vmatpush.msra.mxu0 0.0
      %759 = vmatpush.msra.mxu0 0.0
      %760 = vmatpush.msra.mxu0 0.0
      %761 = vmatpush.msra.mxu0 0.0
      %762 = vmatpush.msra.mxu0 0.0
      %763 = vmatpush.msra.mxu0 0.0
      %764 = vmatpush.msra.mxu0 0.0
      %765 = vmatpush.msra.mxu0 %v688
      %766 = vmatmul.f32.gmra.mxu0 %v680
      %v767 = vpop.f32.mrf.mxu0
      %v768 = vadd.f32 0.0, %v767
      %769 = vdwg.mxu0
      %v770 = vadd.f32 %v624, %v708
      %v771 = vadd.f32 %v625, %v728
      %v772 = vadd.f32 %v626, %v748
      %v773 = vadd.f32 %v627, %v768
      %s774 = scalar_lea.vmem %s2, 16
      %v775 = vld [vmem:[%s774] sm:$0xf]
      %776 = vst [vmem:[#allocation1] ss:$2 sm:$0xff] %v198
      %s777 = scalar_lea.vmem [#allocation1], 16
      %778 = vst [vmem:[%s777] ss:$2 sm:$0xff] %v199
      %v779 = vld.sshfl [vmem:[#allocation1] sm:$0xff pattern:$0x75316420]
      %v780 = vld.sshfl [vmem:[#allocation1 + $0x8] sm:$0xff pattern:$0x75316420]
      %v781 = vld.sshfl [vmem:[#allocation1 + $0x10] sm:$0xff pattern:$0x75316420]
      %v782 = vld.sshfl [vmem:[#allocation1 + $0x18] sm:$0xff pattern:$0x75316420]
      %v784 = vsel %vm294, %v775, 0
      %v786 = vsel %vm298, %v779, 0
      %v788 = vsel %vm298, %v780, 0
      %v790 = vsel %vm298, %v781, 0
      %v792 = vsel %vm298, %v782, 0
      %794 = vmatpush.msra.mxu0 0.0
      %795 = vmatpush.msra.mxu0 0.0
      %796 = vmatpush.msra.mxu0 0.0
      %797 = vmatpush.msra.mxu0 0.0
      %798 = vmatpush.msra.mxu0 0.0
      %799 = vmatpush.msra.mxu0 0.0
      %800 = vmatpush.msra.mxu0 0.0
      %801 = vmatpush.msra.mxu0 0.0
      %802 = vmatpush.msra.mxu0 0.0
      %803 = vmatpush.msra.mxu0 0.0
      %804 = vmatpush.msra.mxu0 0.0
      %805 = vmatpush.msra.mxu0 0.0
      %806 = vmatpush.msra.mxu0 0.0
      %807 = vmatpush.msra.mxu0 0.0
      %808 = vmatpush.msra.mxu0 0.0
      %809 = vmatpush.msra.mxu0 %v786
      %810 = vmatmul.f32.gmra.mxu0 %v784
      %v811 = vpop.f32.mrf.mxu0
      %v812 = vadd.f32 0.0, %v811
      %813 = vdwg.mxu0
      %814 = vmatpush.msra.mxu0 0.0
      %815 = vmatpush.msra.mxu0 0.0
      %816 = vmatpush.msra.mxu0 0.0
      %817 = vmatpush.msra.mxu0 0.0
      %818 = vmatpush.msra.mxu0 0.0
      %819 = vmatpush.msra.mxu0 0.0
      %820 = vmatpush.msra.mxu0 0.0
      %821 = vmatpush.msra.mxu0 0.0
      %822 = vmatpush.msra.mxu0 0.0
      %823 = vmatpush.msra.mxu0 0.0
      %824 = vmatpush.msra.mxu0 0.0
      %825 = vmatpush.msra.mxu0 0.0
      %826 = vmatpush.msra.mxu0 0.0
      %827 = vmatpush.msra.mxu0 0.0
      %828 = vmatpush.msra.mxu0 0.0
      %829 = vmatpush.msra.mxu0 %v788
      %830 = vmatmul.f32.gmra.mxu0 %v784
      %v831 = vpop.f32.mrf.mxu0
      %v832 = vadd.f32 0.0, %v831
      %833 = vdwg.mxu0
      %834 = vmatpush.msra.mxu0 0.0
      %835 = vmatpush.msra.mxu0 0.0
      %836 = vmatpush.msra.mxu0 0.0
      %837 = vmatpush.msra.mxu0 0.0
      %838 = vmatpush.msra.mxu0 0.0
      %839 = vmatpush.msra.mxu0 0.0
      %840 = vmatpush.msra.mxu0 0.0
      %841 = vmatpush.msra.mxu0 0.0
      %842 = vmatpush.msra.mxu0 0.0
      %843 = vmatpush.msra.mxu0 0.0
      %844 = vmatpush.msra.mxu0 0.0
      %845 = vmatpush.msra.mxu0 0.0
      %846 = vmatpush.msra.mxu0 0.0
      %847 = vmatpush.msra.mxu0 0.0
      %848 = vmatpush.msra.mxu0 0.0
      %849 = vmatpush.msra.mxu0 %v790
      %850 = vmatmul.f32.gmra.mxu0 %v784
      %v851 = vpop.f32.mrf.mxu0
      %v852 = vadd.f32 0.0, %v851
      %853 = vdwg.mxu0
      %854 = vmatpush.msra.mxu0 0.0
      %855 = vmatpush.msra.mxu0 0.0
      %856 = vmatpush.msra.mxu0 0.0
      %857 = vmatpush.msra.mxu0 0.0
      %858 = vmatpush.msra.mxu0 0.0
      %859 = vmatpush.msra.mxu0 0.0
      %860 = vmatpush.msra.mxu0 0.0
      %861 = vmatpush.msra.mxu0 0.0
      %862 = vmatpush.msra.mxu0 0.0
      %863 = vmatpush.msra.mxu0 0.0
      %864 = vmatpush.msra.mxu0 0.0
      %865 = vmatpush.msra.mxu0 0.0
      %866 = vmatpush.msra.mxu0 0.0
      %867 = vmatpush.msra.mxu0 0.0
      %868 = vmatpush.msra.mxu0 0.0
      %869 = vmatpush.msra.mxu0 %v792
      %870 = vmatmul.f32.gmra.mxu0 %v784
      %v871 = vpop.f32.mrf.mxu0
      %v872 = vadd.f32 0.0, %v871
      %873 = vdwg.mxu0
      %v874 = vadd.f32 %v770, %v812
      %v875 = vadd.f32 %v771, %v832
      %v876 = vadd.f32 %v772, %v852
      %v877 = vadd.f32 %v773, %v872
      %s878 = scalar_lea.vmem %s1, 5
      %v879 = vld [vmem:[%s878] ss:$8 sm:$0xf]
      %v881 = vperm.slane %v879, 0
      %v882 = vperm.slane %v879, 1
      %v883 = vperm.slane %v879, 2
      %v884 = vperm.slane %v879, 3
      %885 = vrot.lane.b32.xlu0 %v881, 18
      %v886 = vpop.permute.xlu0 %885
      %887 = vrot.lane.b32.xlu0 %v882, 18
      %v888 = vpop.permute.xlu0 %887
      %889 = vrot.lane.b32.xlu0 %v883, 18
      %v890 = vpop.permute.xlu0 %889
      %891 = vrot.lane.b32.xlu0 %v884, 18
      %v892 = vpop.permute.xlu0 %891
      %vm893 = vcmask 146432
      %v894 = vsel %vm893, %v886, %v888
      %v895 = vsel %vm893, %v888, %v890
      %v896 = vsel %vm893, %v890, %v892
      %v902 = vmul.f32 %v226, %v886
      %v903 = vmul.f32 %v218, %v894
      %v904 = vmul.f32 %v219, %v895
      %v905 = vmul.f32 %v220, %v896
      %v906 = vmul.f32 %v227, %v892
      %s907 = scalar_lea.vmem %s2, 20
      %v908 = vld [vmem:[%s907] sm:$0xf]
      %914 = vrot.lane.b32.xlu0 %v902, 110
      %v915 = vpop.permute.xlu0 %914
      %916 = vrot.lane.b32.xlu0 %v903, 110
      %v917 = vpop.permute.xlu0 %916
      %918 = vrot.lane.b32.xlu0 %v904, 110
      %v919 = vpop.permute.xlu0 %918
      %920 = vrot.lane.b32.xlu0 %v905, 110
      %v921 = vpop.permute.xlu0 %920
      %922 = vrot.lane.b32.xlu0 %v906, 110
      %v923 = vpop.permute.xlu0 %922
      %vm924 = vcmask 900096
      %v925 = vsel %vm924, %v915, %v917
      %v926 = vsel %vm924, %v917, %v919
      %v927 = vsel %vm924, %v919, %v921
      %v928 = vsel %vm924, %v921, %v923
      %v930 = vsel %vm294, %v908, 0
      %v932 = vsel %vm298, %v925, 0
      %v934 = vsel %vm298, %v926, 0
      %v936 = vsel %vm298, %v927, 0
      %v938 = vsel %vm298, %v928, 0
      %940 = vmatpush.msra.mxu0 0.0
      %941 = vmatpush.msra.mxu0 0.0
      %942 = vmatpush.msra.mxu0 0.0
      %943 = vmatpush.msra.mxu0 0.0
      %944 = vmatpush.msra.mxu0 0.0
      %945 = vmatpush.msra.mxu0 0.0
      %946 = vmatpush.msra.mxu0 0.0
      %947 = vmatpush.msra.mxu0 0.0
      %948 = vmatpush.msra.mxu0 0.0
      %949 = vmatpush.msra.mxu0 0.0
      %950 = vmatpush.msra.mxu0 0.0
      %951 = vmatpush.msra.mxu0 0.0
      %952 = vmatpush.msra.mxu0 0.0
      %953 = vmatpush.msra.mxu0 0.0
      %954 = vmatpush.msra.mxu0 0.0
      %955 = vmatpush.msra.mxu0 %v932
      %956 = vmatmul.f32.gmra.mxu0 %v930
      %v957 = vpop.f32.mrf.mxu0
      %v958 = vadd.f32 0.0, %v957
      %959 = vdwg.mxu0
      %960 = vmatpush.msra.mxu0 0.0
      %961 = vmatpush.msra.mxu0 0.0
      %962 = vmatpush.msra.mxu0 0.0
      %963 = vmatpush.msra.mxu0 0.0
      %964 = vmatpush.msra.mxu0 0.0
      %965 = vmatpush.msra.mxu0 0.0
      %966 = vmatpush.msra.mxu0 0.0
      %967 = vmatpush.msra.mxu0 0.0
      %968 = vmatpush.msra.mxu0 0.0
      %969 = vmatpush.msra.mxu0 0.0
      %970 = vmatpush.msra.mxu0 0.0
      %971 = vmatpush.msra.mxu0 0.0
      %972 = vmatpush.msra.mxu0 0.0
      %973 = vmatpush.msra.mxu0 0.0
      %974 = vmatpush.msra.mxu0 0.0
      %975 = vmatpush.msra.mxu0 %v934
      %976 = vmatmul.f32.gmra.mxu0 %v930
      %v977 = vpop.f32.mrf.mxu0
      %v978 = vadd.f32 0.0, %v977
      %979 = vdwg.mxu0
      %980 = vmatpush.msra.mxu0 0.0
      %981 = vmatpush.msra.mxu0 0.0
      %982 = vmatpush.msra.mxu0 0.0
      %983 = vmatpush.msra.mxu0 0.0
      %984 = vmatpush.msra.mxu0 0.0
      %985 = vmatpush.msra.mxu0 0.0
      %986 = vmatpush.msra.mxu0 0.0
      %987 = vmatpush.msra.mxu0 0.0
      %988 = vmatpush.msra.mxu0 0.0
      %989 = vmatpush.msra.mxu0 0.0
      %990 = vmatpush.msra.mxu0 0.0
      %991 = vmatpush.msra.mxu0 0.0
      %992 = vmatpush.msra.mxu0 0.0
      %993 = vmatpush.msra.mxu0 0.0
      %994 = vmatpush.msra.mxu0 0.0
      %995 = vmatpush.msra.mxu0 %v936
      %996 = vmatmul.f32.gmra.mxu0 %v930
      %v997 = vpop.f32.mrf.mxu0
      %v998 = vadd.f32 0.0, %v997
      %999 = vdwg.mxu0
      %1000 = vmatpush.msra.mxu0 0.0
      %1001 = vmatpush.msra.mxu0 0.0
      %1002 = vmatpush.msra.mxu0 0.0
      %1003 = vmatpush.msra.mxu0 0.0
      %1004 = vmatpush.msra.mxu0 0.0
      %1005 = vmatpush.msra.mxu0 0.0
      %1006 = vmatpush.msra.mxu0 0.0
      %1007 = vmatpush.msra.mxu0 0.0
      %1008 = vmatpush.msra.mxu0 0.0
      %1009 = vmatpush.msra.mxu0 0.0
      %1010 = vmatpush.msra.mxu0 0.0
      %1011 = vmatpush.msra.mxu0 0.0
      %1012 = vmatpush.msra.mxu0 0.0
      %1013 = vmatpush.msra.mxu0 0.0
      %1014 = vmatpush.msra.mxu0 0.0
      %1015 = vmatpush.msra.mxu0 %v938
      %1016 = vmatmul.f32.gmra.mxu0 %v930
      %v1017 = vpop.f32.mrf.mxu0
      %v1018 = vadd.f32 0.0, %v1017
      %1019 = vdwg.mxu0
      %v1020 = vadd.f32 %v874, %v958
      %v1021 = vadd.f32 %v875, %v978
      %v1022 = vadd.f32 %v876, %v998
      %v1023 = vadd.f32 %v877, %v1018
      %s1024 = scalar_lea.vmem %s1, 6
      %v1025 = vld [vmem:[%s1024] ss:$8 sm:$0xf]
      %v1027 = vperm.slane %v1025, 0
      %v1028 = vperm.slane %v1025, 1
      %v1029 = vperm.slane %v1025, 2
      %v1030 = vperm.slane %v1025, 3
      %1031 = vrot.lane.b32.xlu0 %v1027, 32
      %v1032 = vpop.permute.xlu0 %1031
      %1033 = vrot.lane.b32.xlu0 %v1028, 32
      %v1034 = vpop.permute.xlu0 %1033
      %1035 = vrot.lane.b32.xlu0 %v1029, 32
      %v1036 = vpop.permute.xlu0 %1035
      %1037 = vrot.lane.b32.xlu0 %v1030, 32
      %v1038 = vpop.permute.xlu0 %1037
      %vm1039 = vcmask 261120
      %v1040 = vsel %vm1039, %v1032, %v1034
      %v1041 = vsel %vm1039, %v1034, %v1036
      %v1042 = vsel %vm1039, %v1036, %v1038
      %v1048 = vmul.f32 %v226, %v1032
      %v1049 = vmul.f32 %v218, %v1040
      %v1050 = vmul.f32 %v219, %v1041
      %v1051 = vmul.f32 %v220, %v1042
      %v1052 = vmul.f32 %v227, %v1038
      %s1053 = scalar_lea.vmem %s2, 24
      %v1054 = vld [vmem:[%s1053] sm:$0xf]
      %1060 = vrot.lane.b32.xlu0 %v1048, 96
      %v1061 = vpop.permute.xlu0 %1060
      %1062 = vrot.lane.b32.xlu0 %v1049, 96
      %v1063 = vpop.permute.xlu0 %1062
      %1064 = vrot.lane.b32.xlu0 %v1050, 96
      %v1065 = vpop.permute.xlu0 %1064
      %1066 = vrot.lane.b32.xlu0 %v1051, 96
      %v1067 = vpop.permute.xlu0 %1066
      %1068 = vrot.lane.b32.xlu0 %v1052, 96
      %v1069 = vpop.permute.xlu0 %1068
      %vm1070 = vcmask 785408
      %v1071 = vsel %vm1070, %v1061, %v1063
      %v1072 = vsel %vm1070, %v1063, %v1065
      %v1073 = vsel %vm1070, %v1065, %v1067
      %v1074 = vsel %vm1070, %v1067, %v1069
      %v1076 = vsel %vm294, %v1054, 0
      %v1078 = vsel %vm298, %v1071, 0
      %v1080 = vsel %vm298, %v1072, 0
      %v1082 = vsel %vm298, %v1073, 0
      %v1084 = vsel %vm298, %v1074, 0
      %1086 = vmatpush.msra.mxu0 0.0
      %1087 = vmatpush.msra.mxu0 0.0
      %1088 = vmatpush.msra.mxu0 0.0
      %1089 = vmatpush.msra.mxu0 0.0
      %1090 = vmatpush.msra.mxu0 0.0
      %1091 = vmatpush.msra.mxu0 0.0
      %1092 = vmatpush.msra.mxu0 0.0
      %1093 = vmatpush.msra.mxu0 0.0
      %1094 = vmatpush.msra.mxu0 0.0
      %1095 = vmatpush.msra.mxu0 0.0
      %1096 = vmatpush.msra.mxu0 0.0
      %1097 = vmatpush.msra.mxu0 0.0
      %1098 = vmatpush.msra.mxu0 0.0
      %1099 = vmatpush.msra.mxu0 0.0
      %1100 = vmatpush.msra.mxu0 0.0
      %1101 = vmatpush.msra.mxu0 %v1078
      %1102 = vmatmul.f32.gmra.mxu0 %v1076
      %v1103 = vpop.f32.mrf.mxu0
      %v1104 = vadd.f32 0.0, %v1103
      %1105 = vdwg.mxu0
      %1106 = vmatpush.msra.mxu0 0.0
      %1107 = vmatpush.msra.mxu0 0.0
      %1108 = vmatpush.msra.mxu0 0.0
      %1109 = vmatpush.msra.mxu0 0.0
      %1110 = vmatpush.msra.mxu0 0.0
      %1111 = vmatpush.msra.mxu0 0.0
      %1112 = vmatpush.msra.mxu0 0.0
      %1113 = vmatpush.msra.mxu0 0.0
      %1114 = vmatpush.msra.mxu0 0.0
      %1115 = vmatpush.msra.mxu0 0.0
      %1116 = vmatpush.msra.mxu0 0.0
      %1117 = vmatpush.msra.mxu0 0.0
      %1118 = vmatpush.msra.mxu0 0.0
      %1119 = vmatpush.msra.mxu0 0.0
      %1120 = vmatpush.msra.mxu0 0.0
      %1121 = vmatpush.msra.mxu0 %v1080
      %1122 = vmatmul.f32.gmra.mxu0 %v1076
      %v1123 = vpop.f32.mrf.mxu0
      %v1124 = vadd.f32 0.0, %v1123
      %1125 = vdwg.mxu0
      %1126 = vmatpush.msra.mxu0 0.0
      %1127 = vmatpush.msra.mxu0 0.0
      %1128 = vmatpush.msra.mxu0 0.0
      %1129 = vmatpush.msra.mxu0 0.0
      %1130 = vmatpush.msra.mxu0 0.0
      %1131 = vmatpush.msra.mxu0 0.0
      %1132 = vmatpush.msra.mxu0 0.0
      %1133 = vmatpush.msra.mxu0 0.0
      %1134 = vmatpush.msra.mxu0 0.0
      %1135 = vmatpush.msra.mxu0 0.0
      %1136 = vmatpush.msra.mxu0 0.0
      %1137 = vmatpush.msra.mxu0 0.0
      %1138 = vmatpush.msra.mxu0 0.0
      %1139 = vmatpush.msra.mxu0 0.0
      %1140 = vmatpush.msra.mxu0 0.0
      %1141 = vmatpush.msra.mxu0 %v1082
      %1142 = vmatmul.f32.gmra.mxu0 %v1076
      %v1143 = vpop.f32.mrf.mxu0
      %v1144 = vadd.f32 0.0, %v1143
      %1145 = vdwg.mxu0
      %1146 = vmatpush.msra.mxu0 0.0
      %1147 = vmatpush.msra.mxu0 0.0
      %1148 = vmatpush.msra.mxu0 0.0
      %1149 = vmatpush.msra.mxu0 0.0
      %1150 = vmatpush.msra.mxu0 0.0
      %1151 = vmatpush.msra.mxu0 0.0
      %1152 = vmatpush.msra.mxu0 0.0
      %1153 = vmatpush.msra.mxu0 0.0
      %1154 = vmatpush.msra.mxu0 0.0
      %1155 = vmatpush.msra.mxu0 0.0
      %1156 = vmatpush.msra.mxu0 0.0
      %1157 = vmatpush.msra.mxu0 0.0
      %1158 = vmatpush.msra.mxu0 0.0
      %1159 = vmatpush.msra.mxu0 0.0
      %1160 = vmatpush.msra.mxu0 0.0
      %1161 = vmatpush.msra.mxu0 %v1084
      %1162 = vmatmul.f32.gmra.mxu0 %v1076
      %v1163 = vpop.f32.mrf.mxu0
      %v1164 = vadd.f32 0.0, %v1163
      %1165 = vdwg.mxu0
      %v1166 = vadd.f32 %v1020, %v1104
      %v1167 = vadd.f32 %v1021, %v1124
      %v1168 = vadd.f32 %v1022, %v1144
      %v1169 = vadd.f32 %v1023, %v1164
      %s1170 = scalar_lea.vmem %s1, 7
      %v1171 = vld [vmem:[%s1170] ss:$8 sm:$0xf]
      %v1173 = vperm.slane %v1171, 0
      %v1174 = vperm.slane %v1171, 1
      %v1175 = vperm.slane %v1171, 2
      %v1176 = vperm.slane %v1171, 3
      %1177 = vrot.lane.b32.xlu0 %v1173, 33
      %v1178 = vpop.permute.xlu0 %1177
      %1179 = vrot.lane.b32.xlu0 %v1174, 33
      %v1180 = vpop.permute.xlu0 %1179
      %1181 = vrot.lane.b32.xlu0 %v1175, 33
      %v1182 = vpop.permute.xlu0 %1181
      %1183 = vrot.lane.b32.xlu0 %v1176, 33
      %v1184 = vpop.permute.xlu0 %1183
      %vm1185 = vcmask 269312
      %v1186 = vsel %vm1185, %v1178, %v1180
      %v1187 = vsel %vm1185, %v1180, %v1182
      %v1188 = vsel %vm1185, %v1182, %v1184
      %v1194 = vmul.f32 %v226, %v1178
      %v1195 = vmul.f32 %v218, %v1186
      %v1196 = vmul.f32 %v219, %v1187
      %v1197 = vmul.f32 %v220, %v1188
      %v1198 = vmul.f32 %v227, %v1184
      %s1199 = scalar_lea.vmem %s2, 28
      %v1200 = vld [vmem:[%s1199] sm:$0xf]
      %1206 = vrot.lane.b32.xlu0 %v1194, 95
      %v1207 = vpop.permute.xlu0 %1206
      %1208 = vrot.lane.b32.xlu0 %v1195, 95
      %v1209 = vpop.permute.xlu0 %1208
      %1210 = vrot.lane.b32.xlu0 %v1196, 95
      %v1211 = vpop.permute.xlu0 %1210
      %1212 = vrot.lane.b32.xlu0 %v1197, 95
      %v1213 = vpop.permute.xlu0 %1212
      %1214 = vrot.lane.b32.xlu0 %v1198, 95
      %v1215 = vpop.permute.xlu0 %1214
      %vm1216 = vcmask 777216
      %v1217 = vsel %vm1216, %v1207, %v1209
      %v1218 = vsel %vm1216, %v1209, %v1211
      %v1219 = vsel %vm1216, %v1211, %v1213
      %v1220 = vsel %vm1216, %v1213, %v1215
      %v1222 = vsel %vm294, %v1200, 0
      %v1224 = vsel %vm298, %v1217, 0
      %v1226 = vsel %vm298, %v1218, 0
      %v1228 = vsel %vm298, %v1219, 0
      %v1230 = vsel %vm298, %v1220, 0
      %1232 = vmatpush.msra.mxu0 0.0
      %1233 = vmatpush.msra.mxu0 0.0
      %1234 = vmatpush.msra.mxu0 0.0
      %1235 = vmatpush.msra.mxu0 0.0
      %1236 = vmatpush.msra.mxu0 0.0
      %1237 = vmatpush.msra.mxu0 0.0
      %1238 = vmatpush.msra.mxu0 0.0
      %1239 = vmatpush.msra.mxu0 0.0
      %1240 = vmatpush.msra.mxu0 0.0
      %1241 = vmatpush.msra.mxu0 0.0
      %1242 = vmatpush.msra.mxu0 0.0
      %1243 = vmatpush.msra.mxu0 0.0
      %1244 = vmatpush.msra.mxu0 0.0
      %1245 = vmatpush.msra.mxu0 0.0
      %1246 = vmatpush.msra.mxu0 0.0
      %1247 = vmatpush.msra.mxu0 %v1224
      %1248 = vmatmul.f32.gmra.mxu0 %v1222
      %v1249 = vpop.f32.mrf.mxu0
      %v1250 = vadd.f32 0.0, %v1249
      %1251 = vdwg.mxu0
      %1252 = vmatpush.msra.mxu0 0.0
      %1253 = vmatpush.msra.mxu0 0.0
      %1254 = vmatpush.msra.mxu0 0.0
      %1255 = vmatpush.msra.mxu0 0.0
      %1256 = vmatpush.msra.mxu0 0.0
      %1257 = vmatpush.msra.mxu0 0.0
      %1258 = vmatpush.msra.mxu0 0.0
      %1259 = vmatpush.msra.mxu0 0.0
      %1260 = vmatpush.msra.mxu0 0.0
      %1261 = vmatpush.msra.mxu0 0.0
      %1262 = vmatpush.msra.mxu0 0.0
      %1263 = vmatpush.msra.mxu0 0.0
      %1264 = vmatpush.msra.mxu0 0.0
      %1265 = vmatpush.msra.mxu0 0.0
      %1266 = vmatpush.msra.mxu0 0.0
      %1267 = vmatpush.msra.mxu0 %v1226
      %1268 = vmatmul.f32.gmra.mxu0 %v1222
      %v1269 = vpop.f32.mrf.mxu0
      %v1270 = vadd.f32 0.0, %v1269
      %1271 = vdwg.mxu0
      %1272 = vmatpush.msra.mxu0 0.0
      %1273 = vmatpush.msra.mxu0 0.0
      %1274 = vmatpush.msra.mxu0 0.0
      %1275 = vmatpush.msra.mxu0 0.0
      %1276 = vmatpush.msra.mxu0 0.0
      %1277 = vmatpush.msra.mxu0 0.0
      %1278 = vmatpush.msra.mxu0 0.0
      %1279 = vmatpush.msra.mxu0 0.0
      %1280 = vmatpush.msra.mxu0 0.0
      %1281 = vmatpush.msra.mxu0 0.0
      %1282 = vmatpush.msra.mxu0 0.0
      %1283 = vmatpush.msra.mxu0 0.0
      %1284 = vmatpush.msra.mxu0 0.0
      %1285 = vmatpush.msra.mxu0 0.0
      %1286 = vmatpush.msra.mxu0 0.0
      %1287 = vmatpush.msra.mxu0 %v1228
      %1288 = vmatmul.f32.gmra.mxu0 %v1222
      %v1289 = vpop.f32.mrf.mxu0
      %v1290 = vadd.f32 0.0, %v1289
      %1291 = vdwg.mxu0
      %1292 = vmatpush.msra.mxu0 0.0
      %1293 = vmatpush.msra.mxu0 0.0
      %1294 = vmatpush.msra.mxu0 0.0
      %1295 = vmatpush.msra.mxu0 0.0
      %1296 = vmatpush.msra.mxu0 0.0
      %1297 = vmatpush.msra.mxu0 0.0
      %1298 = vmatpush.msra.mxu0 0.0
      %1299 = vmatpush.msra.mxu0 0.0
      %1300 = vmatpush.msra.mxu0 0.0
      %1301 = vmatpush.msra.mxu0 0.0
      %1302 = vmatpush.msra.mxu0 0.0
      %1303 = vmatpush.msra.mxu0 0.0
      %1304 = vmatpush.msra.mxu0 0.0
      %1305 = vmatpush.msra.mxu0 0.0
      %1306 = vmatpush.msra.mxu0 0.0
      %1307 = vmatpush.msra.mxu0 %v1230
      %1308 = vmatmul.f32.gmra.mxu0 %v1222
      %v1309 = vpop.f32.mrf.mxu0
      %v1310 = vadd.f32 0.0, %v1309
      %1311 = vdwg.mxu0
      %v1312 = vadd.f32 %v1166, %v1250
      %v1313 = vadd.f32 %v1167, %v1270
      %v1314 = vadd.f32 %v1168, %v1290
      %v1315 = vadd.f32 %v1169, %v1310
      %s1316 = scalar_lea.vmem %s1, 32
      %v1317 = vld [vmem:[%s1316] ss:$8 sm:$0xf]
      %v1319 = vperm.slane %v1317, 0
      %v1320 = vperm.slane %v1317, 1
      %v1321 = vperm.slane %v1317, 2
      %v1322 = vperm.slane %v1317, 3
      %1323 = vrot.lane.b32.xlu0 %v1319, 34
      %v1324 = vpop.permute.xlu0 %1323
      %1325 = vrot.lane.b32.xlu0 %v1320, 34
      %v1326 = vpop.permute.xlu0 %1325
      %1327 = vrot.lane.b32.xlu0 %v1321, 34
      %v1328 = vpop.permute.xlu0 %1327
      %1329 = vrot.lane.b32.xlu0 %v1322, 34
      %v1330 = vpop.permute.xlu0 %1329
      %vm1331 = vcmask 277504
      %v1332 = vsel %vm1331, %v1324, %v1326
      %v1333 = vsel %vm1331, %v1326, %v1328
      %v1334 = vsel %vm1331, %v1328, %v1330
      %v1340 = vmul.f32 %v226, %v1324
      %v1341 = vmul.f32 %v218, %v1332
      %v1342 = vmul.f32 %v219, %v1333
      %v1343 = vmul.f32 %v220, %v1334
      %v1344 = vmul.f32 %v227, %v1330
      %s1345 = scalar_lea.vmem %s2, 32
      %v1346 = vld [vmem:[%s1345] sm:$0xf]
      %1352 = vrot.lane.b32.xlu0 %v1340, 94
      %v1353 = vpop.permute.xlu0 %1352
      %1354 = vrot.lane.b32.xlu0 %v1341, 94
      %v1355 = vpop.permute.xlu0 %1354
      %1356 = vrot.lane.b32.xlu0 %v1342, 94
      %v1357 = vpop.permute.xlu0 %1356
      %1358 = vrot.lane.b32.xlu0 %v1343, 94
      %v1359 = vpop.permute.xlu0 %1358
      %1360 = vrot.lane.b32.xlu0 %v1344, 94
      %v1361 = vpop.permute.xlu0 %1360
      %vm1362 = vcmask 769024
      %v1363 = vsel %vm1362, %v1353, %v1355
      %v1364 = vsel %vm1362, %v1355, %v1357
      %v1365 = vsel %vm1362, %v1357, %v1359
      %v1366 = vsel %vm1362, %v1359, %v1361
      %v1368 = vsel %vm294, %v1346, 0
      %v1370 = vsel %vm298, %v1363, 0
      %v1372 = vsel %vm298, %v1364, 0
      %v1374 = vsel %vm298, %v1365, 0
      %v1376 = vsel %vm298, %v1366, 0
      %1378 = vmatpush.msra.mxu0 0.0
      %1379 = vmatpush.msra.mxu0 0.0
      %1380 = vmatpush.msra.mxu0 0.0
      %1381 = vmatpush.msra.mxu0 0.0
      %1382 = vmatpush.msra.mxu0 0.0
      %1383 = vmatpush.msra.mxu0 0.0
      %1384 = vmatpush.msra.mxu0 0.0
      %1385 = vmatpush.msra.mxu0 0.0
      %1386 = vmatpush.msra.mxu0 0.0
      %1387 = vmatpush.msra.mxu0 0.0
      %1388 = vmatpush.msra.mxu0 0.0
      %1389 = vmatpush.msra.mxu0 0.0
      %1390 = vmatpush.msra.mxu0 0.0
      %1391 = vmatpush.msra.mxu0 0.0
      %1392 = vmatpush.msra.mxu0 0.0
      %1393 = vmatpush.msra.mxu0 %v1370
      %1394 = vmatmul.f32.gmra.mxu0 %v1368
      %v1395 = vpop.f32.mrf.mxu0
      %v1396 = vadd.f32 0.0, %v1395
      %1397 = vdwg.mxu0
      %1398 = vmatpush.msra.mxu0 0.0
      %1399 = vmatpush.msra.mxu0 0.0
      %1400 = vmatpush.msra.mxu0 0.0
      %1401 = vmatpush.msra.mxu0 0.0
      %1402 = vmatpush.msra.mxu0 0.0
      %1403 = vmatpush.msra.mxu0 0.0
      %1404 = vmatpush.msra.mxu0 0.0
      %1405 = vmatpush.msra.mxu0 0.0
      %1406 = vmatpush.msra.mxu0 0.0
      %1407 = vmatpush.msra.mxu0 0.0
      %1408 = vmatpush.msra.mxu0 0.0
      %1409 = vmatpush.msra.mxu0 0.0
      %1410 = vmatpush.msra.mxu0 0.0
      %1411 = vmatpush.msra.mxu0 0.0
      %1412 = vmatpush.msra.mxu0 0.0
      %1413 = vmatpush.msra.mxu0 %v1372
      %1414 = vmatmul.f32.gmra.mxu0 %v1368
      %v1415 = vpop.f32.mrf.mxu0
      %v1416 = vadd.f32 0.0, %v1415
      %1417 = vdwg.mxu0
      %1418 = vmatpush.msra.mxu0 0.0
      %1419 = vmatpush.msra.mxu0 0.0
      %1420 = vmatpush.msra.mxu0 0.0
      %1421 = vmatpush.msra.mxu0 0.0
      %1422 = vmatpush.msra.mxu0 0.0
      %1423 = vmatpush.msra.mxu0 0.0
      %1424 = vmatpush.msra.mxu0 0.0
      %1425 = vmatpush.msra.mxu0 0.0
      %1426 = vmatpush.msra.mxu0 0.0
      %1427 = vmatpush.msra.mxu0 0.0
      %1428 = vmatpush.msra.mxu0 0.0
      %1429 = vmatpush.msra.mxu0 0.0
      %1430 = vmatpush.msra.mxu0 0.0
      %1431 = vmatpush.msra.mxu0 0.0
      %1432 = vmatpush.msra.mxu0 0.0
      %1433 = vmatpush.msra.mxu0 %v1374
      %1434 = vmatmul.f32.gmra.mxu0 %v1368
      %v1435 = vpop.f32.mrf.mxu0
      %v1436 = vadd.f32 0.0, %v1435
      %1437 = vdwg.mxu0
      %1438 = vmatpush.msra.mxu0 0.0
      %1439 = vmatpush.msra.mxu0 0.0
      %1440 = vmatpush.msra.mxu0 0.0
      %1441 = vmatpush.msra.mxu0 0.0
      %1442 = vmatpush.msra.mxu0 0.0
      %1443 = vmatpush.msra.mxu0 0.0
      %1444 = vmatpush.msra.mxu0 0.0
      %1445 = vmatpush.msra.mxu0 0.0
      %1446 = vmatpush.msra.mxu0 0.0
      %1447 = vmatpush.msra.mxu0 0.0
      %1448 = vmatpush.msra.mxu0 0.0
      %1449 = vmatpush.msra.mxu0 0.0
      %1450 = vmatpush.msra.mxu0 0.0
      %1451 = vmatpush.msra.mxu0 0.0
      %1452 = vmatpush.msra.mxu0 0.0
      %1453 = vmatpush.msra.mxu0 %v1376
      %1454 = vmatmul.f32.gmra.mxu0 %v1368
      %v1455 = vpop.f32.mrf.mxu0
      %v1456 = vadd.f32 0.0, %v1455
      %1457 = vdwg.mxu0
      %v1458 = vadd.f32 %v1312, %v1396
      %v1459 = vadd.f32 %v1313, %v1416
      %v1460 = vadd.f32 %v1314, %v1436
      %v1461 = vadd.f32 %v1315, %v1456
      %v1462 = vld [vmem:[%s3] sm:$0xf]
      %1464 = vset.pattern.permute.xlu0 0
      %1465 = vperm.xlu0 %1464, %v1462
      %v1466 = vpop.permute.xlu0 %1465
      %v1468 = vadd.f32 %v1458, %v1466
      %v1469 = vadd.f32 %v1459, %v1466
      %v1470 = vadd.f32 %v1460, %v1466
      %v1471 = vadd.f32 %v1461, %v1466
      %vm1472 = vcmp.gt.f32.partialorder %v1468, 0.0
      %vm1473 = vcmp.gt.f32.partialorder %v1469, 0.0
      %vm1474 = vcmp.gt.f32.partialorder %v1470, 0.0
      %vm1475 = vcmp.gt.f32.partialorder %v1471, 0.0
      %v1476 = vmul.f32 %v1468, 0.01
      %v1477 = vmul.f32 %v1469, 0.01
      %v1478 = vmul.f32 %v1470, 0.01
      %v1479 = vmul.f32 %v1471, 0.01
      %v1480 = vsel %vm1472, %v1468, %v1476
      %v1481 = vsel %vm1473, %v1469, %v1477
      %v1482 = vsel %vm1474, %v1470, %v1478
      %v1483 = vsel %vm1475, %v1471, %v1479
      %v1488 = vrot.slane %v1481, 4
      %v1489 = vrot.slane %v1483, 4
      %v1490 = vsel %vm298, %v1480, %v1488
      %v1491 = vsel %vm298, %v1482, %v1489
      %1494 = vst [vmem:[%s197] sm:$0xff] %v1490
      %1495 = vst [vmem:[%s197 + $0x8] sm:$0xff] %v1491
      %p1496 = scmp.lt.s32.totalorder %s15, 1
      %s1497 = scalar_select %p1496, %s15, 1
      %s1498 = smul.addr %s1497, 4
      %s1499 = smul.addr %s1498, 4
      %s1500 = scalar_lea.vmem %s4, %s1499
      // Predicated region
      $region37: #{fourier_conv_forward.4} parent=35 // pred_check
        %p1501 = pneg %p122
      $region38: #{fourier_conv_forward.4} parent=35 // pred_check_branch
        %1503 = sbr.rel (%p1501) target = $region40
      $region39: #{fourier_conv_forward.4} parent=35 // pred_region
        _
      $region40: #{fourier_conv_forward.4} parent=35 // pred_fallthru
        _
    $region36: #{fourier_conv_forward.4} parent=5 // pred_fallthru
      _
    %p1504 = scmp.le.s32.totalorder 2, %s10
    // Predicated region
    $region41: #{fourier_conv_forward.4} parent=5 // pred_check
      %p1505 = pneg %p1504
    $region42: #{fourier_conv_forward.4} parent=5 // pred_check_branch
      %1507 = sbr.rel (%p1505) target = $region44
    $region43: #{fourier_conv_forward.4} parent=5 // pred_region
      %s1508 = ssub.s32 %s10, 2
      // Predicated region
      $region45: #{fourier_conv_forward.4} parent=43 // pred_check
        %p1509 = pneg %p128
      $region46: #{fourier_conv_forward.4} parent=43 // pred_check_branch
        %1511 = sbr.rel (%p1509) target = $region48
      $region47: #{fourier_conv_forward.4} parent=43 // pred_region
        %p1512 = scmp.lt.s32.totalorder %s16, 1
        %s1513 = scalar_select %p1512, %s16, 1
        %s1514 = smul.addr %s1513, 4
        %s1515 = smul.addr %s1514, 4
        %s1516 = scalar_lea.vmem %s4, %s1515
      $region48: #{fourier_conv_forward.4} parent=43 // pred_fallthru
        _
    $region44: #{fourier_conv_forward.4} parent=5 // pred_fallthru
      _
  $region6: #{fourier_conv_forward.4} parent=0 // loop_footer
    %s14 = sadd.s32 1, %s10
  $region7: #{fourier_conv_forward.4} parent=0 // loop_footer_branch
    %9 = sbr.rel target = $region3
  $region8: #{fourier_conv_forward.4} parent=0 // loop_exit
    _

// kernel: fourier_conv_forward.7
$region0: #{fourier_conv_forward.7}
  #allocation0 [shape = 'u32[]', space=smem, size = 0x4, offset = 0x4, fixed_abs, tag = 'smem constant byte address 0x4 - core index']
  #allocation1 [shape = 'u32[72,128]{1,0:T(1,128)}', space=vmem, size = 0x9000, scoped, tag = 'internal scratch']
  %s0 = inlined_call_operand.vmem [shape: f32[2,4,512], index: 0, kind: input, shape index: {}]
  %s1 = inlined_call_operand.vmem [shape: f32[2,4,512], index: 1, kind: input, shape index: {}]
  %s2 = inlined_call_operand.vmem [shape: f32[1,4,4], index: 2, kind: input, shape index: {}]
  %s3 = inlined_call_operand.vmem [shape: f32[4,1], index: 3, kind: input, shape index: {}]
  %s4 = inlined_call_operand.vmem [shape: f32[2,4,512], index: 4, kind: output, shape index: {}]
  %s5 = sld [smem:[#allocation0]]
  $region49: #{fourier_conv_forward.7} parent=0
    _
  %s7 = ssub.s32 1, %s5
  %s8 = scalar_select 0, %s7, %s5
  loop: start=0, step=1, limit=4
  $region2: #{fourier_conv_forward.7} parent=0 // loop_pre_header
    _
  $region3: #{fourier_conv_forward.7} parent=0 // loop_header
    %s10 = sphi 0, %s14
    %p11 = scmp.ge.s32.totalorder %s10, 4
    %s20 = sphi 0, %s22
    %s23 = sphi 0, %s20
    %s24 = sphi 0, %s23
    %s40 = sphi 0, %s24
    %s46 = sphi 0, %s48
    %s49 = sphi 0, %s46
    %s50 = sphi 0, %s49
    %s66 = sphi 0, %s50
    %s70 = sphi 0, %s70
    %s72 = sphi 0, %s70
    %s73 = sphi 0, %s72
    %s87 = sphi 0, %s73
    %s91 = sphi 0, %s91
    %s93 = sphi 0, %s91
    %s94 = sphi 0, %s93
    %s108 = sphi 0, %s94
    %s114 = sphi 0, %s116
    %s117 = sphi 0, %s114
    %s118 = sphi 0, %s117
    %s134 = sphi 0, %s118
  $region4: #{fourier_conv_forward.7} parent=0 // loop_header_branch
    %13 = sbr.rel (%p11) target = $region8
  $region5: #{fourier_conv_forward.7} parent=0 // loop_body
    %s15 = ssub.s32 %s10, 1
    %s16 = ssub.s32 %s10, 2
    %s17 = sadd.s32 %s10, 1
    %s18 = ssub.s32 %s10, %s17
    %p19 = scmp.eq.s32.totalorder %s18, 0
    %s21 = sadd.s32 %s20, 1
    %s22 = scalar_select %p19, %s20, %s21
    %p25 = pneg %p19
    %p26 = scmp.eq.s32.totalorder %s10, 1
    %p27 = por %p25, %p26
    %p28 = scmp.ne.s32.totalorder %s20, %s23
    %p29 = scmp.eq.s32.totalorder %s10, 0
    %p30 = por %p28, %p29
    %p31 = scmp.ne.s32.totalorder %s20, %s23
    %p32 = scmp.eq.s32.totalorder %s15, 1
    %p33 = por %p31, %p32
    %p34 = scmp.ne.s32.totalorder %s23, %s24
    %p35 = scmp.eq.s32.totalorder %s15, 0
    %p36 = por %p34, %p35
    %p37 = scmp.ne.s32.totalorder %s23, %s24
    %p38 = scmp.eq.s32.totalorder %s16, 1
    %p39 = por %p37, %p38
    %p41 = scmp.ne.s32.totalorder %s24, %s40
    %p42 = scmp.eq.s32.totalorder %s16, 0
    %p43 = por %p41, %p42
    %s44 = ssub.s32 %s10, %s17
    %p45 = scmp.eq.s32.totalorder %s44, 0
    %s47 = sadd.s32 %s46, 1
    %s48 = scalar_select %p45, %s46, %s47
    %p51 = pneg %p45
    %p52 = scmp.eq.s32.totalorder %s10, 1
    %p53 = por %p51, %p52
    %p54 = scmp.ne.s32.totalorder %s46, %s49
    %p55 = scmp.eq.s32.totalorder %s10, 0
    %p56 = por %p54, %p55
    %p57 = scmp.ne.s32.totalorder %s46, %s49
    %p58 = scmp.eq.s32.totalorder %s15, 1
    %p59 = por %p57, %p58
    %p60 = scmp.ne.s32.totalorder %s49, %s50
    %p61 = scmp.eq.s32.totalorder %s15, 0
    %p62 = por %p60, %p61
    %p63 = scmp.ne.s32.totalorder %s49, %s50
    %p64 = scmp.eq.s32.totalorder %s16, 1
    %p65 = por %p63, %p64
    %p67 = scmp.ne.s32.totalorder %s50, %s66
    %p68 = scmp.eq.s32.totalorder %s16, 0
    %p69 = por %p67, %p68
    %s71 = sadd.s32 %s70, 1
    %p74 = scmp.eq.s32.totalorder %s10, 1
    %p75 = scmp.ne.s32.totalorder %s70, %s72
    %p76 = scmp.eq.s32.totalorder %s10, 0
    %p77 = por %p75, %p76
    %p78 = scmp.ne.s32.totalorder %s70, %s72
    %p79 = scmp.eq.s32.totalorder %s15, 1
    %p80 = por %p78, %p79
    %p81 = scmp.ne.s32.totalorder %s72, %s73
    %p82 = scmp.eq.s32.totalorder %s15, 0
    %p83 = por %p81, %p82
    %p84 = scmp.ne.s32.totalorder %s72, %s73
    %p85 = scmp.eq.s32.totalorder %s16, 1
    %p86 = por %p84, %p85
    %p88 = scmp.ne.s32.totalorder %s73, %s87
    %p89 = scmp.eq.s32.totalorder %s16, 0
    %p90 = por %p88, %p89
    %s92 = sadd.s32 %s91, 1
    %p95 = scmp.eq.s32.totalorder %s10, 1
    %p96 = scmp.ne.s32.totalorder %s91, %s93
    %p97 = scmp.eq.s32.totalorder %s10, 0
    %p98 = por %p96, %p97
    %p99 = scmp.ne.s32.totalorder %s91, %s93
    %p100 = scmp.eq.s32.totalorder %s15, 1
    %p101 = por %p99, %p100
    %p102 = scmp.ne.s32.totalorder %s93, %s94
    %p103 = scmp.eq.s32.totalorder %s15, 0
    %p104 = por %p102, %p103
    %p105 = scmp.ne.s32.totalorder %s93, %s94
    %p106 = scmp.eq.s32.totalorder %s16, 1
    %p107 = por %p105, %p106
    %p109 = scmp.ne.s32.totalorder %s94, %s108
    %p110 = scmp.eq.s32.totalorder %s16, 0
    %p111 = por %p109, %p110
    %s112 = ssub.s32 %s10, %s17
    %p113 = scmp.eq.s32.totalorder %s112, 0
    %s115 = sadd.s32 %s114, 1
    %s116 = scalar_select %p113, %s114, %s115
    %p119 = pneg %p113
    %p120 = scmp.eq.s32.totalorder %s10, 1
    %p121 = por %p119, %p120
    %p122 = scmp.ne.s32.totalorder %s114, %s117
    %p123 = scmp.eq.s32.totalorder %s10, 0
    %p124 = por %p122, %p123
    %p125 = scmp.ne.s32.totalorder %s114, %s117
    %p126 = scmp.eq.s32.totalorder %s15, 1
    %p127 = por %p125, %p126
    %p128 = scmp.ne.s32.totalorder %s117, %s118
    %p129 = scmp.eq.s32.totalorder %s15, 0
    %p130 = por %p128, %p129
    %p131 = scmp.ne.s32.totalorder %s117, %s118
    %p132 = scmp.eq.s32.totalorder %s16, 1
    %p133 = por %p131, %p132
    %p135 = scmp.ne.s32.totalorder %s118, %s134
    %p136 = scmp.eq.s32.totalorder %s16, 0
    %p137 = por %p135, %p136
    %p138 = scmp.le.s32.totalorder 1, %s10
    %p139 = scmp.lt.s32.totalorder %s10, 3
    %p140 = pnand %p138, %p139
    %p141 = pneg %p140
    // Predicated region
    $region9: #{fourier_conv_forward.7} parent=5 // pred_check
      _
    $region10: #{fourier_conv_forward.7} parent=5 // pred_check_branch
      %143 = sbr.rel (%p140) target = $region12
    $region11: #{fourier_conv_forward.7} parent=5 // pred_region
      %s144 = ssub.s32 %s10, 1
      // Predicated region
      $region13: #{fourier_conv_forward.7} parent=11 // pred_check
        %p145 = pneg %p83
      $region14: #{fourier_conv_forward.7} parent=11 // pred_check_branch
        %147 = sbr.rel (%p145) target = $region16
      $region15: #{fourier_conv_forward.7} parent=11 // pred_region
        _
      $region16: #{fourier_conv_forward.7} parent=11 // pred_fallthru
        _
      // Predicated region
      $region17: #{fourier_conv_forward.7} parent=11 // pred_check
        %p148 = pneg %p104
      $region18: #{fourier_conv_forward.7} parent=11 // pred_check_branch
        %150 = sbr.rel (%p148) target = $region20
      $region19: #{fourier_conv_forward.7} parent=11 // pred_region
        _
      $region20: #{fourier_conv_forward.7} parent=11 // pred_fallthru
        _
    $region12: #{fourier_conv_forward.7} parent=5 // pred_fallthru
      _
    %p151 = scmp.lt.s32.totalorder %s10, 2
    // Predicated region
    $region21: #{fourier_conv_forward.7} parent=5 // pred_check
      %p152 = pneg %p151
    $region22: #{fourier_conv_forward.7} parent=5 // pred_check_branch
      %154 = sbr.rel (%p152) target = $region24
    $region23: #{fourier_conv_forward.7} parent=5 // pred_region
      // Predicated region
      $region25: #{fourier_conv_forward.7} parent=23 // pred_check
        %p155 = pneg %p30
      $region26: #{fourier_conv_forward.7} parent=23 // pred_check_branch
        %157 = sbr.rel (%p155) target = $region28
      $region27: #{fourier_conv_forward.7} parent=23 // pred_region
        %p158 = scmp.lt.s32.totalorder %s10, 1
        %s159 = scalar_select %p158, %s10, 1
        %s160 = smul.addr %s159, 4
        %s161 = smul.addr %s160, 4
        %s162 = scalar_lea.vmem %s0, %s161
      $region28: #{fourier_conv_forward.7} parent=23 // pred_fallthru
        _
      // Predicated region
      $region29: #{fourier_conv_forward.7} parent=23 // pred_check
        %p163 = pneg %p56
      $region30: #{fourier_conv_forward.7} parent=23 // pred_check_branch
        %165 = sbr.rel (%p163) target = $region32
      $region31: #{fourier_conv_forward.7} parent=23 // pred_region
        %p166 = scmp.lt.s32.totalorder %s10, 1
        %s167 = scalar_select %p166, %s10, 1
        %s168 = smul.addr %s167, 4
        %s169 = smul.addr %s168, 4
        %s170 = scalar_lea.vmem %s1, %s169
      $region32: #{fourier_conv_forward.7} parent=23 // pred_fallthru
        _
    $region24: #{fourier_conv_forward.7} parent=5 // pred_fallthru
      _
    %p171 = scmp.le.s32.totalorder 1, %s10
    %p172 = scmp.lt.s32.totalorder %s10, 3
    %p173 = pnand %p171, %p172
    %p174 = pneg %p173
    // Predicated region
    $region33: #{fourier_conv_forward.7} parent=5 // pred_check
      _
    $region34: #{fourier_conv_forward.7} parent=5 // pred_check_branch
      %176 = sbr.rel (%p173) target = $region36
    $region35: #{fourier_conv_forward.7} parent=5 // pred_region
      %s177 = ssub.s32 %s10, 1
      %p178 = scmp.lt.s32.totalorder %s15, 1
      %s179 = scalar_select %p178, %s15, 1
      %s180 = smul.addr %s179, 4
      %s181 = smul.addr %s180, 4
      %s182 = scalar_lea.vmem %s0, %s181
      %p183 = pneg %p36
      %p184 = pneg %p33
      %p185 = scmp.lt.s32.totalorder %s15, 1
      %s186 = scalar_select %p185, %s15, 1
      %s187 = smul.addr %s186, 4
      %s188 = smul.addr %s187, 4
      %s189 = scalar_lea.vmem %s1, %s188
      %p190 = pneg %p62
      %p191 = pneg %p59
      %p192 = pneg %p83
      %p193 = pneg %p80
      %p194 = pneg %p104
      %p195 = pneg %p101
      %p196 = pneg %p130
      %p197 = pneg %p127
      %p198 = scmp.lt.s32.totalorder %s15, 1
      %s199 = scalar_select %p198, %s15, 1
      %s200 = smul.addr %s199, 4
      %s201 = smul.addr %s200, 4
      %s202 = scalar_lea.vmem %s4, %s201
      %p203 = scmp.lt.s32.totalorder %s15, 1
      %s204 = scalar_select %p203, %s15, 1
      %s205 = smul.addr %s204, 4
      %s206 = smul.addr %s205, 4
      %s207 = scalar_lea.vmem %s0, %s206
      %p208 = scmp.lt.s32.totalorder %s15, 1
      %s209 = scalar_select %p208, %s15, 1
      %s210 = smul.addr %s209, 4
      %s211 = smul.addr %s210, 4
      %s212 = scalar_lea.vmem %s1, %s211
      %p213 = scmp.lt.s32.totalorder %s15, 1
      %s214 = scalar_select %p213, %s15, 1
      %s215 = smul.addr %s214, 4
      %s216 = smul.addr %s215, 4
      %s217 = scalar_lea.vmem %s4, %s216
      %v218 = vld [vmem:[%s207] sm:$0xff]
      %v219 = vld [vmem:[%s207 + $0x8] sm:$0xff]
      %v220 = vld [vmem:[%s212] sm:$0xff]
      %v221 = vld [vmem:[%s212 + $0x8] sm:$0xff]
      %v222 = vadd.f32 %v218, %v220
      %v223 = vadd.f32 %v219, %v221
      %v224 = vld [vmem:[%s2] sm:$0xf]
      %v225 = vld [vmem:[%s3] sm:$0xf]
      %227 = vset.pattern.permute.xlu0 0
      %228 = vperm.xlu0 %227, %v225
      %v229 = vpop.permute.xlu0 %228
      %233 = vst [vmem:[#allocation1] ss:$2 sm:$0xff] %v222
      %s234 = scalar_lea.vmem [#allocation1], 16
      %235 = vst [vmem:[%s234] ss:$2 sm:$0xff] %v223
      %v236 = vld.sshfl [vmem:[#allocation1] sm:$0xff pattern:$0x75316420]
      %v237 = vld.sshfl [vmem:[#allocation1 + $0x8] sm:$0xff pattern:$0x75316420]
      %v238 = vld.sshfl [vmem:[#allocation1 + $0x10] sm:$0xff pattern:$0x75316420]
      %v239 = vld.sshfl [vmem:[#allocation1 + $0x18] sm:$0xff pattern:$0x75316420]
      %vm240 = vcmask 31744
      %v242 = vsel %vm240, %v224, 0
      %vm244 = vcmask 1043456
      %v245 = vsel %vm244, %v236, 0
      %v247 = vsel %vm244, %v237, 0
      %v249 = vsel %vm244, %v238, 0
      %v251 = vsel %vm244, %v239, 0
      %253 = vmatpush.msra.mxu0 0.0
      %254 = vmatpush.msra.mxu0 0.0
      %255 = vmatpush.msra.mxu0 0.0
      %256 = vmatpush.msra.mxu0 0.0
      %257 = vmatpush.msra.mxu0 0.0
      %258 = vmatpush.msra.mxu0 0.0
      %259 = vmatpush.msra.mxu0 0.0
      %260 = vmatpush.msra.mxu0 0.0
      %261 = vmatpush.msra.mxu0 0.0
      %262 = vmatpush.msra.mxu0 0.0
      %263 = vmatpush.msra.mxu0 0.0
      %264 = vmatpush.msra.mxu0 0.0
      %265 = vmatpush.msra.mxu0 0.0
      %266 = vmatpush.msra.mxu0 0.0
      %267 = vmatpush.msra.mxu0 0.0
      %268 = vmatpush.msra.mxu0 %v245
      %269 = vmatmul.f32.gmra.mxu0 %v242
      %v270 = vpop.f32.mrf.mxu0
      %v271 = vadd.f32 %v229, %v270
      %272 = vdwg.mxu0
      %273 = vmatpush.msra.mxu0 0.0
      %274 = vmatpush.msra.mxu0 0.0
      %275 = vmatpush.msra.mxu0 0.0
      %276 = vmatpush.msra.mxu0 0.0
      %277 = vmatpush.msra.mxu0 0.0
      %278 = vmatpush.msra.mxu0 0.0
      %279 = vmatpush.msra.mxu0 0.0
      %280 = vmatpush.msra.mxu0 0.0
      %281 = vmatpush.msra.mxu0 0.0
      %282 = vmatpush.msra.mxu0 0.0
      %283 = vmatpush.msra.mxu0 0.0
      %284 = vmatpush.msra.mxu0 0.0
      %285 = vmatpush.msra.mxu0 0.0
      %286 = vmatpush.msra.mxu0 0.0
      %287 = vmatpush.msra.mxu0 0.0
      %288 = vmatpush.msra.mxu0 %v247
      %289 = vmatmul.f32.gmra.mxu0 %v242
      %v290 = vpop.f32.mrf.mxu0
      %v291 = vadd.f32 %v229, %v290
      %292 = vdwg.mxu0
      %293 = vmatpush.msra.mxu0 0.0
      %294 = vmatpush.msra.mxu0 0.0
      %295 = vmatpush.msra.mxu0 0.0
      %296 = vmatpush.msra.mxu0 0.0
      %297 = vmatpush.msra.mxu0 0.0
      %298 = vmatpush.msra.mxu0 0.0
      %299 = vmatpush.msra.mxu0 0.0
      %300 = vmatpush.msra.mxu0 0.0
      %301 = vmatpush.msra.mxu0 0.0
      %302 = vmatpush.msra.mxu0 0.0
      %303 = vmatpush.msra.mxu0 0.0
      %304 = vmatpush.msra.mxu0 0.0
      %305 = vmatpush.msra.mxu0 0.0
      %306 = vmatpush.msra.mxu0 0.0
      %307 = vmatpush.msra.mxu0 0.0
      %308 = vmatpush.msra.mxu0 %v249
      %309 = vmatmul.f32.gmra.mxu0 %v242
      %v310 = vpop.f32.mrf.mxu0
      %v311 = vadd.f32 %v229, %v310
      %312 = vdwg.mxu0
      %313 = vmatpush.msra.mxu0 0.0
      %314 = vmatpush.msra.mxu0 0.0
      %315 = vmatpush.msra.mxu0 0.0
      %316 = vmatpush.msra.mxu0 0.0
      %317 = vmatpush.msra.mxu0 0.0
      %318 = vmatpush.msra.mxu0 0.0
      %319 = vmatpush.msra.mxu0 0.0
      %320 = vmatpush.msra.mxu0 0.0
      %321 = vmatpush.msra.mxu0 0.0
      %322 = vmatpush.msra.mxu0 0.0
      %323 = vmatpush.msra.mxu0 0.0
      %324 = vmatpush.msra.mxu0 0.0
      %325 = vmatpush.msra.mxu0 0.0
      %326 = vmatpush.msra.mxu0 0.0
      %327 = vmatpush.msra.mxu0 0.0
      %328 = vmatpush.msra.mxu0 %v251
      %329 = vmatmul.f32.gmra.mxu0 %v242
      %v330 = vpop.f32.mrf.mxu0
      %v331 = vadd.f32 %v229, %v330
      %332 = vdwg.mxu0
      %v337 = vrot.slane %v291, 4
      %v338 = vrot.slane %v331, 4
      %v339 = vsel %vm244, %v271, %v337
      %v340 = vsel %vm244, %v311, %v338
      %343 = vst [vmem:[%s217] sm:$0xff] %v339
      %344 = vst [vmem:[%s217 + $0x8] sm:$0xff] %v340
      %p345 = scmp.lt.s32.totalorder %s15, 1
      %s346 = scalar_select %p345, %s15, 1
      %s347 = smul.addr %s346, 4
      %s348 = smul.addr %s347, 4
      %s349 = scalar_lea.vmem %s4, %s348
      // Predicated region
      $region37: #{fourier_conv_forward.7} parent=35 // pred_check
        %p350 = pneg %p127
      $region38: #{fourier_conv_forward.7} parent=35 // pred_check_branch
        %352 = sbr.rel (%p350) target = $region40
      $region39: #{fourier_conv_forward.7} parent=35 // pred_region
        _
      $region40: #{fourier_conv_forward.7} parent=35 // pred_fallthru
        _
    $region36: #{fourier_conv_forward.7} parent=5 // pred_fallthru
      _
    %p353 = scmp.le.s32.totalorder 2, %s10
    // Predicated region
    $region41: #{fourier_conv_forward.7} parent=5 // pred_check
      %p354 = pneg %p353
    $region42: #{fourier_conv_forward.7} parent=5 // pred_check_branch
      %356 = sbr.rel (%p354) target = $region44
    $region43: #{fourier_conv_forward.7} parent=5 // pred_region
      %s357 = ssub.s32 %s10, 2
      // Predicated region
      $region45: #{fourier_conv_forward.7} parent=43 // pred_check
        %p358 = pneg %p133
      $region46: #{fourier_conv_forward.7} parent=43 // pred_check_branch
        %360 = sbr.rel (%p358) target = $region48
      $region47: #{fourier_conv_forward.7} parent=43 // pred_region
        %p361 = scmp.lt.s32.totalorder %s16, 1
        %s362 = scalar_select %p361, %s16, 1
        %s363 = smul.addr %s362, 4
        %s364 = smul.addr %s363, 4
        %s365 = scalar_lea.vmem %s4, %s364
      $region48: #{fourier_conv_forward.7} parent=43 // pred_fallthru
        _
    $region44: #{fourier_conv_forward.7} parent=5 // pred_fallthru
      _
  $region6: #{fourier_conv_forward.7} parent=0 // loop_footer
    %s14 = sadd.s32 1, %s10
  $region7: #{fourier_conv_forward.7} parent=0 // loop_footer_branch
    %9 = sbr.rel target = $region3
  $region8: #{fourier_conv_forward.7} parent=0 // loop_exit
    _

</llo_original>
